<compile_context>
chip_gen: v7x
topology: tpu7x:2x2x1
jax: 0.10.0
libtpu: 0.0.40
codegen_flags: <defaults>
</compile_context>

<pallas_src>
import functools
import numpy as np
import jax
import jax.numpy as jnp
from jax.experimental import pallas as pl
from jax.experimental.pallas import tpu as pltpu


# ----------------------------------------------------------------------------
# In-kernel helpers (traced inside Pallas kernels; all math in f32)
# ----------------------------------------------------------------------------
def _ln(x, g, b, eps):
    mu = jnp.mean(x, axis=-1, keepdims=True)
    d = x - mu
    var = jnp.mean(d * d, axis=-1, keepdims=True)
    return d * jax.lax.rsqrt(var + eps) * g + b


def _gelu_tanh(x):
    # TODO(synk): bert-base uses exact erf GELU; tanh approximation is used here
    # for a guaranteed Mosaic lowering (EUP tanh).
    c = 0.7978845608028654  # sqrt(2/pi)
    return 0.5 * x * (1.0 + jnp.tanh(c * (x + 0.044715 * x * x * x)))


def _softmax_rows(s):
    s = s - jnp.max(s, axis=-1, keepdims=True)
    p = jnp.exp(s)
    return p * pl.reciprocal(jnp.sum(p, axis=-1, keepdims=True), approx=True)


def _cost(flops, transcendentals, bytes_accessed):
    return pl.CostEstimate(flops=int(flops), transcendentals=int(transcendentals),
                           bytes_accessed=int(bytes_accessed))


_LAYER_PARAMS = pltpu.CompilerParams(dimension_semantics=("parallel",),
                                     vmem_limit_bytes=64 * 1024 * 1024)


# ----------------------------------------------------------------------------
# Pallas kernels
# ----------------------------------------------------------------------------
def _linear_kernel(x_ref, w_ref, b_ref, o_ref, *, activation):
    y = jnp.dot(x_ref[...], w_ref[...], preferred_element_type=jnp.float32) + b_ref[...]
    if activation == "tanh":
        y = jnp.tanh(y)
    o_ref[...] = y


def pallas_linear(x, w, b, activation=None, block_m=512):
    """y = act(x @ w + b); bf16 MXU inputs, f32 accumulation / output."""
    K = x.shape[-1]
    N = w.shape[1]
    lead = x.shape[:-1]
    M = int(np.prod(lead)) if lead else 1
    x2 = x.reshape(M, K).astype(jnp.bfloat16)
    wb = w.astype(jnp.bfloat16)
    b2 = b.reshape(1, N).astype(jnp.float32)
    tm = min(M, block_m)
    # TODO(synk): add a K-tiled "arbitrary" grid axis + VMEM f32 accumulator for
    # production-sized K/N (toy dims fit a single weight block).
    out = pl.pallas_call(
        functools.partial(_linear_kernel, activation=activation),
        out_shape=jax.ShapeDtypeStruct((M, N), jnp.float32),
        grid=(pl.cdiv(M, tm),),
        in_specs=[
            pl.BlockSpec((tm, K), lambda i: (i, 0)),
            pl.BlockSpec((K, N), lambda i: (0, 0)),
            pl.BlockSpec((1, N), lambda i: (0, 0)),
        ],
        out_specs=pl.BlockSpec((tm, N), lambda i: (i, 0)),
        compiler_params=pltpu.CompilerParams(dimension_semantics=("parallel",)),
    )(x2, wb, b2)
    return out.reshape(lead + (N,))


def _bert_layer_kernel(x_ref, wqkv_ref, bqkv_ref, wo_ref, bo_ref,
                       ln1g_ref, ln1b_ref, wfi_ref, bfi_ref, wfo_ref, bfo_ref,
                       ln2g_ref, ln2b_ref, o_ref, *, heads):
    x = x_ref[0].astype(jnp.float32)                        # (S, H)
    S, H = x.shape
    dk = H // heads
    # fused QKV projection (Q columns are pre-scaled by 1/sqrt(dk) host-side)
    qkv = jnp.dot(x.astype(jnp.bfloat16), wqkv_ref[...],
                  preferred_element_type=jnp.float32) + bqkv_ref[...]
    qh = jnp.swapaxes(qkv[:, 0 * H:1 * H].reshape(S, heads, dk), 0, 1).astype(jnp.bfloat16)
    kh = jnp.swapaxes(qkv[:, 1 * H:2 * H].reshape(S, heads, dk), 0, 1).astype(jnp.bfloat16)
    vh = jnp.swapaxes(qkv[:, 2 * H:3 * H].reshape(S, heads, dk), 0, 1).astype(jnp.bfloat16)
    # head-batched attention on the MXU
    s = jnp.einsum('hqd,hkd->hqk', qh, kh, preferred_element_type=jnp.float32)
    p = _softmax_rows(s)                                    # no bias: reference passes no mask
    ctx = jnp.einsum('hqk,hkd->hqd', p.astype(jnp.bfloat16), vh,
                     preferred_element_type=jnp.float32)    # (heads, S, dk)
    ctx_all = jnp.swapaxes(ctx, 0, 1).reshape(S, H)         # concat heads -> one deep-K proj
    att = jnp.dot(ctx_all.astype(jnp.bfloat16), wo_ref[...],
                  preferred_element_type=jnp.float32) + bo_ref[...]
    x1 = _ln(x + att, ln1g_ref[...], ln1b_ref[...], 1e-12)
    ff = _gelu_tanh(jnp.dot(x1.astype(jnp.bfloat16), wfi_ref[...],
                            preferred_element_type=jnp.float32) + bfi_ref[...])
    ff = jnp.dot(ff.astype(jnp.bfloat16), wfo_ref[...],
                 preferred_element_type=jnp.float32) + bfo_ref[...]
    o_ref[0] = _ln(x1 + ff, ln2g_ref[...], ln2b_ref[...], 1e-12).astype(o_ref.dtype)


def pallas_bert_layer(x, lyr, heads):
    B, S, H = x.shape
    F = lyr["fi"]["w"].shape[1]
    dk = H // heads
    kern = functools.partial(_bert_layer_kernel, heads=heads)

    def w2(shape):
        return pl.BlockSpec(shape, lambda b: (0, 0))

    flops = B * (2 * S * H * 3 * H + 4 * heads * S * S * dk + 2 * S * H * H + 4 * S * H * F)
    trans = B * (heads * S * S + S * F)
    byts = 2 * (2 * B * S * H) + 2 * (3 * H * H + H * H + 2 * H * F) + 4 * (3 * H + 6 * H + F)

    return pl.pallas_call(
        kern,
        out_shape=jax.ShapeDtypeStruct((B, S, H), jnp.bfloat16),
        grid=(B,),
        in_specs=[
            pl.BlockSpec((1, S, H), lambda b: (b, 0, 0)),
            w2((H, 3 * H)), w2((1, 3 * H)),
            w2((H, H)), w2((1, H)),
            w2((1, H)), w2((1, H)),
            w2((H, F)), w2((1, F)),
            w2((F, H)), w2((1, H)),
            w2((1, H)), w2((1, H)),
        ],
        out_specs=pl.BlockSpec((1, S, H), lambda b: (b, 0, 0)),
        compiler_params=_LAYER_PARAMS,
        cost_estimate=_cost(flops, trans, byts),
    )(x.astype(jnp.bfloat16),
      lyr["qkv"]["w"].astype(jnp.bfloat16), lyr["qkv"]["b"],
      lyr["o"]["w"].astype(jnp.bfloat16), lyr["o"]["b"],
      lyr["ln1"]["g"], lyr["ln1"]["b"],
      lyr["fi"]["w"].astype(jnp.bfloat16), lyr["fi"]["b"],
      lyr["fo"]["w"].astype(jnp.bfloat16), lyr["fo"]["b"],
      lyr["ln2"]["g"], lyr["ln2"]["b"])


def _rgat_layer_kernel(x_ref, rel_ref, bias_ref,
                       wqkv_ref, bqkv_ref, wrk_ref, wrv_ref, brv_ref,
                       wo_ref, bo_ref, ln1g_ref, ln1b_ref,
                       wf1_ref, bf1_ref, wf2_ref, bf2_ref,
                       ln2g_ref, ln2b_ref, o_ref, *, heads):
    # Relation-aware (Shaw-style) transformer layer used by RGATEncoder.
    # TODO(synk): exact RGATEncoder source not provided; pre-norm layer with
    # structure-aware attention (same semantics as the previous version).
    x = x_ref[0].astype(jnp.float32)                        # (S, D)
    rel = rel_ref[0].astype(jnp.float32)                    # (S, S, dep_dim)
    bias = bias_ref[0]                                      # (S, S) additive mask, f32
    S, D = x.shape
    dk = D // heads
    dep_dim = rel.shape[-1]

    xn = _ln(x, ln1g_ref[...], ln1b_ref[...], 1e-6)
    qkv = jnp.dot(xn.astype(jnp.bfloat16), wqkv_ref[...],
                  preferred_element_type=jnp.float32) + bqkv_ref[...]
    qh = jnp.swapaxes(qkv[:, 0 * D:1 * D].reshape(S, heads, dk), 0, 1).astype(jnp.bfloat16)
    kh = jnp.swapaxes(qkv[:, 1 * D:2 * D].reshape(S, heads, dk), 0, 1).astype(jnp.bfloat16)
    vh = jnp.swapaxes(qkv[:, 2 * D:3 * D].reshape(S, heads, dk), 0, 1).astype(jnp.bfloat16)

    # content attention scores (head-batched MXU matmul)
    s = jnp.einsum('hqd,hkd->hqk', qh, kh, preferred_element_type=jnp.float32)

    # key-side relation score: qrel = q @ Wrk^T (one head-batched matmul), then
    # dep_dim VPU broadcast-mult-adds over (heads,S,S).  brk contributes a
    # per-query constant that cancels in the softmax, so it is not needed.
    qrel = jax.lax.dot_general(qh, wrk_ref[...], (((2,), (1,)), ((), ())),
                               preferred_element_type=jnp.float32)   # (heads, S, dep_dim)
    s_rel = jnp.zeros_like(s)
    for e in range(dep_dim):
        s_rel = s_rel + qrel[:, :, e:e + 1] * rel[None, :, :, e]

    p = _softmax_rows(s + s_rel + bias[None, :, :])

    ctx = jnp.einsum('hqk,hkd->hqd', p.astype(jnp.bfloat16), vh,
                     preferred_element_type=jnp.float32)             # (heads, S, dk)

    # value-side relation term: prel_e = sum_j p * rel[..,e] (XLU row-reduce),
    # accumulated against rows of Wrv (VPU mult-adds). sum_j p == 1 so +brv is exact.
    wrv = wrv_ref[...].astype(jnp.float32)                            # (dep_dim, dk)
    ctx = ctx + brv_ref[...][None, :, :]
    for e in range(dep_dim):
        prel_e = jnp.sum(p * rel[None, :, :, e], axis=-1, keepdims=True)   # (heads, S, 1)
        ctx = ctx + prel_e * wrv[e:e + 1, :][None, :, :]

    ctx_all = jnp.swapaxes(ctx, 0, 1).reshape(S, D)                   # one deep-K projection
    att = jnp.dot(ctx_all.astype(jnp.bfloat16), wo_ref[...],
                  preferred_element_type=jnp.float32) + bo_ref[...]
    x1 = x + att
    xn2 = _ln(x1, ln2g_ref[...], ln2b_ref[...], 1e-6)
    ff = jnp.maximum(jnp.dot(xn2.astype(jnp.bfloat16), wf1_ref[...],
                             preferred_element_type=jnp.float32) + bf1_ref[...], 0.0)
    out = x1 + jnp.dot(ff.astype(jnp.bfloat16), wf2_ref[...],
                       preferred_element_type=jnp.float32) + bf2_ref[...]
    o_ref[0] = out.astype(o_ref.dtype)


def pallas_rgat_layer(x, rel, bias, lyr, heads):
    B, S, D = x.shape
    dep_dim = rel.shape[-1]
    dk = D // heads
    d_ff = lyr["f1"]["w"].shape[1]
    kern = functools.partial(_rgat_layer_kernel, heads=heads)

    def w2(shape):
        return pl.BlockSpec(shape, lambda b: (0, 0))

    flops = B * (2 * S * D * 3 * D + 4 * heads * S * S * dk + 2 * heads * S * dk * dep_dim
                 + 4 * heads * S * S * dep_dim + 2 * S * D * D + 4 * S * D * d_ff)
    trans = B * heads * S * S
    byts = (2 * (2 * B * S * D) + 2 * B * S * S * dep_dim + 4 * B * S * S
            + 2 * (3 * D * D + D * D + 2 * D * d_ff + 2 * dep_dim * dk)
            + 4 * (3 * D + 6 * D + d_ff + dk))

    return pl.pallas_call(
        kern,
        out_shape=jax.ShapeDtypeStruct((B, S, D), jnp.bfloat16),
        grid=(B,),
        in_specs=[
            pl.BlockSpec((1, S, D), lambda b: (b, 0, 0)),
            pl.BlockSpec((1, S, S, dep_dim), lambda b: (b, 0, 0, 0)),
            pl.BlockSpec((1, S, S), lambda b: (b, 0, 0)),
            w2((D, 3 * D)), w2((1, 3 * D)),
            w2((dep_dim, dk)),
            w2((dep_dim, dk)), w2((1, dk)),
            w2((D, D)), w2((1, D)),
            w2((1, D)), w2((1, D)),
            w2((D, d_ff)), w2((1, d_ff)),
            w2((d_ff, D)), w2((1, D)),
            w2((1, D)), w2((1, D)),
        ],
        out_specs=pl.BlockSpec((1, S, D), lambda b: (b, 0, 0)),
        compiler_params=_LAYER_PARAMS,
        cost_estimate=_cost(flops, trans, byts),
    )(x.astype(jnp.bfloat16), rel.astype(jnp.bfloat16), bias,
      lyr["qkv"]["w"].astype(jnp.bfloat16), lyr["qkv"]["b"],
      lyr["rk"]["w"].astype(jnp.bfloat16),
      lyr["rv"]["w"].astype(jnp.bfloat16), lyr["rv"]["b"],
      lyr["o"]["w"].astype(jnp.bfloat16), lyr["o"]["b"],
      lyr["ln1"]["g"], lyr["ln1"]["b"],
      lyr["f1"]["w"].astype(jnp.bfloat16), lyr["f1"]["b"],
      lyr["f2"]["w"].astype(jnp.bfloat16), lyr["f2"]["b"],
      lyr["ln2"]["g"], lyr["ln2"]["b"])


def _pool_gate_kernel(g_ref, t_ref, m_ref, wg_g_ref, wg_t_ref, bg_ref, o_ref):
    g = g_ref[0]                                             # (S, D)
    t = t_ref[0]                                             # (S, D)
    m = m_ref[0]                                             # (1, S) aspect mask
    wn = jnp.maximum(jnp.sum(m, axis=-1, keepdims=True), 1.0)  # guard empty mask
    gpool = jnp.dot(m, g, preferred_element_type=jnp.float32) / wn   # (1, D)
    tpool = jnp.dot(m, t, preferred_element_type=jnp.float32) / wn   # (1, D)
    gate = jax.nn.sigmoid(
        jnp.dot(gpool, wg_g_ref[...], preferred_element_type=jnp.float32)
        + jnp.dot(tpool, wg_t_ref[...], preferred_element_type=jnp.float32)
        + bg_ref[...])
    o_ref[0] = gate * gpool + (1.0 - gate) * tpool


def pallas_pool_gate(graph_out, bert_out, mask, wg, bg):
    B, S, D = graph_out.shape
    m3 = mask.reshape(B, 1, S).astype(jnp.float32)
    wg_g = wg[:D, :]                                          # host-side split: no lane concat
    wg_t = wg[D:, :]
    out = pl.pallas_call(
        _pool_gate_kernel,
        out_shape=jax.ShapeDtypeStruct((B, 1, D), jnp.float32),
        grid=(B,),
        in_specs=[
            pl.BlockSpec((1, S, D), lambda b: (b, 0, 0)),
            pl.BlockSpec((1, S, D), lambda b: (b, 0, 0)),
            pl.BlockSpec((1, 1, S), lambda b: (b, 0, 0)),
            pl.BlockSpec((D, D), lambda b: (0, 0)),
            pl.BlockSpec((D, D), lambda b: (0, 0)),
            pl.BlockSpec((1, D), lambda b: (0, 0)),
        ],
        out_specs=pl.BlockSpec((1, 1, D), lambda b: (b, 0, 0)),
        compiler_params=pltpu.CompilerParams(dimension_semantics=("parallel",)),
    )(graph_out, bert_out, m3, wg_g, wg_t, bg)
    return out[:, 0, :]


# ----------------------------------------------------------------------------
# JAX glue: LayerNorm, parameter init, sub-model forwards
# ----------------------------------------------------------------------------
def layer_norm(x, g, b, eps=1e-12):
    mu = jnp.mean(x, axis=-1, keepdims=True)
    var = jnp.mean((x - mu) ** 2, axis=-1, keepdims=True)
    return (x - mu) / jnp.sqrt(var + eps) * g + b


class PRNG:
    def __init__(self, key):
        self.key = key

    def next(self):
        self.key, sub = jax.random.split(self.key)
        return sub


def dense_params(rng, din, dout):
    return {
        "w": jax.random.normal(rng.next(), (din, dout), jnp.float32) * 0.02,
        "b": jnp.zeros((1, dout), jnp.float32),
    }


def fold_q_scale(p, d_model, heads):
    """Fold 1/sqrt(dk) into the Q columns of a fused QKV projection (one-time)."""
    scale = 1.0 / float(np.sqrt(d_model // heads))
    return {"w": p["w"].at[:, :d_model].multiply(scale),
            "b": p["b"].at[:, :d_model].multiply(scale)}


def ln_params(d):
    return {"g": jnp.ones((1, d), jnp.float32), "b": jnp.zeros((1, d), jnp.float32)}


def emb_table(rng, n, d):
    e = jax.random.normal(rng.next(), (n, d), jnp.float32) * 0.02
    return e.at[0].set(0.0)  # padding_idx=0


def init_params(args, rng):
    H = args["hidden_dim"]
    D = args["bert_out_dim"]
    p = {}
    # ABSAEncoder.__init__ embeddings (pos/post created but unused in forward)
    p["pos_emb"] = emb_table(rng, args["pos_size"], args["pos_dim"])
    p["post_emb"] = emb_table(rng, args["post_size"], args["post_dim"])
    p["dep_emb"] = emb_table(rng, args["dep_size"], args["dep_dim"])

    # synthetic small BERT standing in for bert-base-uncased (no checkpoint load)
    bert = {
        "word_emb": jax.random.normal(rng.next(), (args["vocab_size"], H), jnp.float32) * 0.02,
        "pos_emb": jax.random.normal(rng.next(), (args["max_position"], H), jnp.float32) * 0.02,
        "type_emb": jax.random.normal(rng.next(), (args["type_vocab"], H), jnp.float32) * 0.02,
        "emb_ln": ln_params(H),
        "layers": [],
        "pooler": dense_params(rng, H, H),
    }
    for _ in range(args["bert_num_layer"]):
        bert["layers"].append({
            "qkv": fold_q_scale(dense_params(rng, H, 3 * H), H, args["bert_heads"]),
            "o": dense_params(rng, H, H),
            "ln1": ln_params(H),
            "fi": dense_params(rng, H, args["bert_ffn"]),
            "fo": dense_params(rng, args["bert_ffn"], H),
            "ln2": ln_params(H),
        })
    p["bert"] = bert

    # DoubleEncoder.dense : Linear(hidden_dim -> bert_out_dim)
    p["dense"] = dense_params(rng, H, D)

    # RGATEncoder (num_layer layers, 4 heads, d_ff = hidden_dim, structure-aware)
    dk = D // 4
    graph = {"layers": [], "final_ln": ln_params(D)}
    for _ in range(args["num_layer"]):
        graph["layers"].append({
            "qkv": fold_q_scale(dense_params(rng, D, 3 * D), D, 4),
            "o": dense_params(rng, D, D),
            # rk bias is kept for fidelity but not used (cancels in softmax)
            "rk": dense_params(rng, args["dep_dim"], dk),
            "rv": dense_params(rng, args["dep_dim"], dk),
            "ln1": ln_params(D), "ln2": ln_params(D),
            "f1": dense_params(rng, D, args["hidden_dim"]),
            "f2": dense_params(rng, args["hidden_dim"], D),
        })
    p["graph"] = graph

    # output_merge == 'gate' : Linear(2*bert_out_dim -> bert_out_dim)
    p["gate"] = dense_params(rng, 2 * D, D)
    return p


def bert_forward(bp, input_ids, token_type_ids, heads):
    B, S = input_ids.shape
    pos_ids = jnp.arange(S)[None, :]
    x = bp["word_emb"][input_ids] + bp["pos_emb"][pos_ids] + bp["type_emb"][token_type_ids]
    x = layer_norm(x, bp["emb_ln"]["g"], bp["emb_ln"]["b"], eps=1e-12)
    x = x.astype(jnp.bfloat16)
    for lyr in bp["layers"]:
        x = pallas_bert_layer(x, lyr, heads)        # fully fused per-layer kernel (bf16 io)
    pooled = pallas_linear(x[:, 0, :], bp["pooler"]["w"], bp["pooler"]["b"],
                           activation="tanh")
    return x, pooled


def rgat_encoder_forward(gp, x, attn_bias, rel_embs, heads):
    xb = x.astype(jnp.bfloat16)
    rel_b = rel_embs.astype(jnp.bfloat16)
    for lyr in gp["layers"]:
        xb = pallas_rgat_layer(xb, rel_b, attn_bias, lyr, heads)
    return layer_norm(xb.astype(jnp.float32), gp["final_ln"]["g"], gp["final_ln"]["b"],
                      eps=1e-6)


def head_to_adj(maxlen, head, deprel, length, directed=False, self_loop=True):
    # TODO(synk): simplified host-side re-implementation of head_to_adj
    # (dependency heads -> adjacency + relation-label matrices).
    adj = np.zeros((maxlen, maxlen), dtype=np.float32)
    lab = np.zeros((maxlen, maxlen), dtype=np.int64)
    for i in range(length):
        h = int(head[i])
        if 0 < h <= maxlen:
            adj[i, h - 1] = 1.0
            lab[i, h - 1] = int(deprel[i])
            if not directed:
                adj[h - 1, i] = 1.0
                lab[h - 1, i] = int(deprel[i])
    if self_loop:
        for i in range(length):
            adj[i, i] = 1.0
            lab[i, i] = 1  # self-loop relation id
    return adj, lab


def absa_encoder_forward(params, args, inputs):
    (tok, asp, pos, head, deprel, post, mask, l,
     text_raw_bert_indices, bert_sequence, bert_segments_ids) = inputs
    l_np = np.asarray(l)
    maxlen = int(l_np.max())

    # adjacency + relation labels (host-side data prep, matches forward loop)
    adj_lst, lab_lst = [], []
    for idx in range(len(l_np)):
        a, lb = head_to_adj(maxlen, np.asarray(head)[idx], np.asarray(deprel)[idx],
                            int(l_np[idx]), directed=args["direct"],
                            self_loop=args["loop"])
        adj_lst.append(a[None])
        lab_lst.append(lb[None])
    adj = jnp.asarray(np.concatenate(adj_lst, 0))
    label_all = jnp.asarray(np.concatenate(lab_lst, 0))

    # ---------------- DoubleEncoder ----------------
    bert_sequence = bert_sequence[:, : bert_segments_ids.shape[1]]
    bert_out, bert_pool_output = bert_forward(
        params["bert"], bert_sequence, bert_segments_ids, args["bert_heads"])
    # in_drop: nn.Dropout in eval mode == identity
    bert_out = bert_out[:, :maxlen, :]
    bert_out = pallas_linear(bert_out, params["dense"]["w"], params["dense"]["b"])

    # attention mask: adj.eq(0) + key padding mask (sequence_mask(lengths))
    kp = jnp.asarray(np.arange(maxlen)[None, :] >= l_np[:, None])        # (B, S)
    attn_bias = jnp.where((adj == 0) | kp[:, None, :], -1e9, 0.0).astype(jnp.float32)

    dep_relation_embs = params["dep_emb"][label_all]                     # (B,S,S,dep_dim)

    graph_out = rgat_encoder_forward(
        params["graph"], bert_out, attn_bias, dep_relation_embs, heads=4)

    # -------- fused aspect-masked mean pooling + gated merge --------
    m = jnp.asarray(np.asarray(mask, dtype=np.float32)[:, :maxlen])
    merged_outputs = pallas_pool_gate(graph_out, bert_out, m,
                                      params["gate"]["w"], params["gate"]["b"])

    return jnp.concatenate([merged_outputs, bert_pool_output], axis=1)


# ----------------------------------------------------------------------------
# Main
# ----------------------------------------------------------------------------
if __name__ == "__main__":
    args = dict(
        pos_size=20, pos_dim=8, post_size=20, post_dim=8,
        dep_size=10, dep_dim=8,
        hidden_dim=32,        # BERT hidden size == args.hidden_dim
        bert_out_dim=32,
        num_layer=2, bert_num_layer=2, bert_heads=4,
        vocab_size=60, max_position=16, type_vocab=2, bert_ffn=64,
        model="rgat", output_merge="gate",
        direct=False, loop=True,
    )

    rng = PRNG(jax.random.PRNGKey(0))
    params = init_params(args, rng)

    B = 2
    l = np.array([8, 6], dtype=np.int64)
    maxlen = int(l.max())
    bert_len = 12

    ikey = jax.random.PRNGKey(0)
    k1, k2, k3, k4, k5, k6, k7 = jax.random.split(ikey, 7)

    tok = jax.random.randint(k1, (B, maxlen), 1, args["vocab_size"], jnp.int32)
    asp = jax.random.randint(k2, (B, 4), 1, args["vocab_size"], jnp.int32)
    pos = jax.random.randint(k3, (B, maxlen), 1, args["pos_size"], jnp.int32)
    head = np.asarray(jax.random.randint(k4, (B, maxlen), 0, maxlen + 1, jnp.int32))
    deprel = np.asarray(jax.random.randint(k5, (B, maxlen), 1, args["dep_size"], jnp.int32))
    post = jax.random.randint(k6, (B, maxlen), 1, args["post_size"], jnp.int32)

    mask = np.zeros((B, maxlen), dtype=np.float32)   # aspect mask
    mask[:, 1:3] = 1.0

    text_raw_bert_indices = jax.random.randint(k7, (B, bert_len), 1, args["vocab_size"], jnp.int32)
    bert_sequence = jax.random.randint(k7, (B, bert_len), 1, args["vocab_size"], jnp.int32)
    bert_segments_ids = jnp.concatenate(
        [jnp.zeros((B, 9), jnp.int32), jnp.ones((B, 3), jnp.int32)], axis=1)

    inputs = (tok, asp, pos, head, deprel, post, mask, l,
              text_raw_bert_indices, bert_sequence, bert_segments_ids)

    out = absa_encoder_forward(params, args, inputs)
    out = jax.block_until_ready(out)
    assert out.shape == (B, args["bert_out_dim"] + args["hidden_dim"])
    assert bool(jnp.all(jnp.isfinite(out)))
    print("KERNEL_OK")
</pallas_src>

<mosaic_0001>
module attributes {stable_mosaic.version = 11 : i64} {
  func.func @_bert_layer_kernel(%arg0: i32, %arg1: memref<1x12x32xbf16, #tpu.memory_space<vmem>>, %arg2: memref<32x96xbf16, #tpu.memory_space<vmem>>, %arg3: memref<1x96xf32, #tpu.memory_space<vmem>>, %arg4: memref<32x32xbf16, #tpu.memory_space<vmem>>, %arg5: memref<1x32xf32, #tpu.memory_space<vmem>>, %arg6: memref<1x32xf32, #tpu.memory_space<vmem>>, %arg7: memref<1x32xf32, #tpu.memory_space<vmem>>, %arg8: memref<32x64xbf16, #tpu.memory_space<vmem>>, %arg9: memref<1x64xf32, #tpu.memory_space<vmem>>, %arg10: memref<64x32xbf16, #tpu.memory_space<vmem>>, %arg11: memref<1x32xf32, #tpu.memory_space<vmem>>, %arg12: memref<1x32xf32, #tpu.memory_space<vmem>>, %arg13: memref<1x32xf32, #tpu.memory_space<vmem>>, %arg14: memref<1x12x32xbf16, #tpu.memory_space<vmem>>) attributes {dimension_semantics = [#tpu.dimension_semantics<parallel>], iteration_bounds = array<i64: 2>, scalar_prefetch = 0 : i64, scratch_operands = 0 : i64, tpu.core_type = #tpu.core_type<tc>, window_params = [{transform_indices = @transform_0, window_bounds = array<i64: 1, 12, 32>}, {pipeline_mode = #tpu.pipeline_mode<synchronous>, transform_indices = @transform_1, window_bounds = array<i64: 32, 96>}, {pipeline_mode = #tpu.pipeline_mode<synchronous>, transform_indices = @transform_2, window_bounds = array<i64: 1, 96>}, {pipeline_mode = #tpu.pipeline_mode<synchronous>, transform_indices = @transform_3, window_bounds = array<i64: 32, 32>}, {pipeline_mode = #tpu.pipeline_mode<synchronous>, transform_indices = @transform_4, window_bounds = array<i64: 1, 32>}, {pipeline_mode = #tpu.pipeline_mode<synchronous>, transform_indices = @transform_5, window_bounds = array<i64: 1, 32>}, {pipeline_mode = #tpu.pipeline_mode<synchronous>, transform_indices = @transform_6, window_bounds = array<i64: 1, 32>}, {pipeline_mode = #tpu.pipeline_mode<synchronous>, transform_indices = @transform_7, window_bounds = array<i64: 32, 64>}, {pipeline_mode = #tpu.pipeline_mode<synchronous>, transform_indices = @transform_8, window_bounds = array<i64: 1, 64>}, {pipeline_mode = #tpu.pipeline_mode<synchronous>, transform_indices = @transform_9, window_bounds = array<i64: 64, 32>}, {pipeline_mode = #tpu.pipeline_mode<synchronous>, transform_indices = @transform_10, window_bounds = array<i64: 1, 32>}, {pipeline_mode = #tpu.pipeline_mode<synchronous>, transform_indices = @transform_11, window_bounds = array<i64: 1, 32>}, {pipeline_mode = #tpu.pipeline_mode<synchronous>, transform_indices = @transform_12, window_bounds = array<i64: 1, 32>}, {transform_indices = @transform_13, window_bounds = array<i64: 1, 12, 32>}]} {
    %c0 = arith.constant 0 : index
    %c0_0 = arith.constant 0 : index
    %c0_1 = arith.constant 0 : index
    %0 = vector.load %arg1[%c0, %c0_0, %c0_1] : memref<1x12x32xbf16, #tpu.memory_space<vmem>>, vector<1x12x32xbf16>
    %1 = vector.shape_cast %0 : vector<1x12x32xbf16> to vector<12x32xbf16>
    %2 = arith.extf %1 : vector<12x32xbf16> to vector<12x32xf32>
    %3 = arith.truncf %2 : vector<12x32xf32> to vector<12x32xbf16>
    %c0_2 = arith.constant 0 : index
    %c0_3 = arith.constant 0 : index
    %4 = vector.load %arg2[%c0_2, %c0_3] : memref<32x96xbf16, #tpu.memory_space<vmem>>, vector<32x96xbf16>
    %cst = arith.constant dense<0.000000e+00> : vector<12x96xf32>
    %5 = tpu.matmul %3, %4, %cst {dimension_numbers = #tpu.dot_dimension_numbers<[1], [0], [0], [1], [0, 0, 1, 1], [], []>} : vector<12x32xbf16>, vector<32x96xbf16>, vector<12x96xf32> -> vector<12x96xf32>
    %c0_4 = arith.constant 0 : index
    %c0_5 = arith.constant 0 : index
    %6 = vector.load %arg3[%c0_4, %c0_5] : memref<1x96xf32, #tpu.memory_space<vmem>>, vector<1x96xf32>
    %7 = vector.broadcast %6 : vector<1x96xf32> to vector<12x96xf32>
    %8 = arith.addf %5, %7 : vector<12x96xf32>
    %9 = vector.extract_strided_slice %8 {offsets = [0, 0], sizes = [12, 32], strides = [1, 1]} : vector<12x96xf32> to vector<12x32xf32>
    %10 = vector.shape_cast %9 : vector<12x32xf32> to vector<12x4x8xf32>
    %11 = tpu.transpose %10, [1, 0, 2] : vector<12x4x8xf32> -> vector<4x12x8xf32>
    %12 = arith.truncf %11 : vector<4x12x8xf32> to vector<4x12x8xbf16>
    %13 = vector.extract_strided_slice %8 {offsets = [0, 32], sizes = [12, 32], strides = [1, 1]} : vector<12x96xf32> to vector<12x32xf32>
    %14 = vector.shape_cast %13 : vector<12x32xf32> to vector<12x4x8xf32>
    %15 = tpu.transpose %14, [1, 0, 2] : vector<12x4x8xf32> -> vector<4x12x8xf32>
    %16 = arith.truncf %15 : vector<4x12x8xf32> to vector<4x12x8xbf16>
    %17 = vector.extract_strided_slice %8 {offsets = [0, 64], sizes = [12, 32], strides = [1, 1]} : vector<12x96xf32> to vector<12x32xf32>
    %18 = vector.shape_cast %17 : vector<12x32xf32> to vector<12x4x8xf32>
    %19 = tpu.transpose %18, [1, 0, 2] : vector<12x4x8xf32> -> vector<4x12x8xf32>
    %20 = arith.truncf %19 : vector<4x12x8xf32> to vector<4x12x8xbf16>
    "tpu.trace_start"() <{level = 10 : i32, message = "hqd,hkd->hqk"}> : () -> ()
    %cst_6 = arith.constant dense<0.000000e+00> : vector<4x12x12xf32>
    %21 = tpu.matmul %12, %16, %cst_6 {dimension_numbers = #tpu.dot_dimension_numbers<[2], [2], [1], [1], [0, 0, 0, 1, 1, 1], [0], [0]>} : vector<4x12x8xbf16>, vector<4x12x8xbf16>, vector<4x12x12xf32> -> vector<4x12x12xf32>
    "tpu.trace_stop"() : () -> ()
    %cst_7 = arith.constant dense<0xFF800000> : vector<4x12xf32>
    %22 = vector.multi_reduction <maximumf>, %21, %cst_7 [2] : vector<4x12x12xf32> to vector<4x12xf32>
    %23 = vector.shape_cast %22 : vector<4x12xf32> to vector<4x12x1xf32>
    %24 = vector.broadcast %23 : vector<4x12x1xf32> to vector<4x12x12xf32>
    %25 = arith.subf %21, %24 : vector<4x12x12xf32>
    %26 = math.exp %25 : vector<4x12x12xf32>
    %cst_8 = arith.constant dense<0.000000e+00> : vector<4x12xf32>
    %27 = vector.multi_reduction <add>, %26, %cst_8 [2] : vector<4x12x12xf32> to vector<4x12xf32>
    %28 = vector.shape_cast %27 : vector<4x12xf32> to vector<4x12x1xf32>
    %29 = tpu.reciprocal %28 {approx = true} : vector<4x12x1xf32> -> vector<4x12x1xf32>
    %30 = vector.broadcast %29 : vector<4x12x1xf32> to vector<4x12x12xf32>
    %31 = arith.mulf %26, %30 : vector<4x12x12xf32>
    %32 = arith.truncf %31 : vector<4x12x12xf32> to vector<4x12x12xbf16>
    "tpu.trace_start"() <{level = 10 : i32, message = "hqk,hkd->hqd"}> : () -> ()
    %cst_9 = arith.constant dense<0.000000e+00> : vector<4x12x8xf32>
    %33 = tpu.matmul %32, %20, %cst_9 {dimension_numbers = #tpu.dot_dimension_numbers<[2], [1], [1], [2], [0, 0, 0, 1, 1, 2], [0], [0]>} : vector<4x12x12xbf16>, vector<4x12x8xbf16>, vector<4x12x8xf32> -> vector<4x12x8xf32>
    "tpu.trace_stop"() : () -> ()
    %34 = tpu.transpose %33, [1, 0, 2] : vector<4x12x8xf32> -> vector<12x4x8xf32>
    %35 = vector.shape_cast %34 : vector<12x4x8xf32> to vector<12x32xf32>
    %36 = arith.truncf %35 : vector<12x32xf32> to vector<12x32xbf16>
    %c0_10 = arith.constant 0 : index
    %c0_11 = arith.constant 0 : index
    %37 = vector.load %arg4[%c0_10, %c0_11] : memref<32x32xbf16, #tpu.memory_space<vmem>>, vector<32x32xbf16>
    %cst_12 = arith.constant dense<0.000000e+00> : vector<12x32xf32>
    %38 = tpu.matmul %36, %37, %cst_12 {dimension_numbers = #tpu.dot_dimension_numbers<[1], [0], [0], [1], [0, 0, 1, 1], [], []>} : vector<12x32xbf16>, vector<32x32xbf16>, vector<12x32xf32> -> vector<12x32xf32>
    %c0_13 = arith.constant 0 : index
    %c0_14 = arith.constant 0 : index
    %39 = vector.load %arg5[%c0_13, %c0_14] : memref<1x32xf32, #tpu.memory_space<vmem>>, vector<1x32xf32>
    %40 = vector.broadcast %39 : vector<1x32xf32> to vector<12x32xf32>
    %41 = arith.addf %38, %40 : vector<12x32xf32>
    %42 = arith.addf %2, %41 : vector<12x32xf32>
    %c0_15 = arith.constant 0 : index
    %c0_16 = arith.constant 0 : index
    %43 = vector.load %arg6[%c0_15, %c0_16] : memref<1x32xf32, #tpu.memory_space<vmem>>, vector<1x32xf32>
    %c0_17 = arith.constant 0 : index
    %c0_18 = arith.constant 0 : index
    %44 = vector.load %arg7[%c0_17, %c0_18] : memref<1x32xf32, #tpu.memory_space<vmem>>, vector<1x32xf32>
    %cst_19 = arith.constant dense<0.000000e+00> : vector<12xf32>
    %45 = vector.multi_reduction <add>, %42, %cst_19 [1] : vector<12x32xf32> to vector<12xf32>
    %46 = vector.shape_cast %45 : vector<12xf32> to vector<12x1xf32>
    %cst_20 = arith.constant 3.200000e+01 : f32
    %47 = vector.broadcast %cst_20 : f32 to vector<12x1xf32>
    %48 = arith.divf %46, %47 : vector<12x1xf32>
    %49 = vector.broadcast %48 : vector<12x1xf32> to vector<12x32xf32>
    %50 = arith.subf %42, %49 : vector<12x32xf32>
    %51 = arith.mulf %50, %50 : vector<12x32xf32>
    %cst_21 = arith.constant dense<0.000000e+00> : vector<12xf32>
    %52 = vector.multi_reduction <add>, %51, %cst_21 [1] : vector<12x32xf32> to vector<12xf32>
    %53 = vector.shape_cast %52 : vector<12xf32> to vector<12x1xf32>
    %cst_22 = arith.constant 3.200000e+01 : f32
    %54 = vector.broadcast %cst_22 : f32 to vector<12x1xf32>
    %55 = arith.divf %53, %54 : vector<12x1xf32>
    %cst_23 = arith.constant 9.99999996E-13 : f32
    %56 = vector.broadcast %cst_23 : f32 to vector<12x1xf32>
    %57 = arith.addf %55, %56 : vector<12x1xf32>
    %58 = math.rsqrt %57 : vector<12x1xf32>
    %59 = vector.broadcast %58 : vector<12x1xf32> to vector<12x32xf32>
    %60 = arith.mulf %50, %59 : vector<12x32xf32>
    %61 = vector.broadcast %43 : vector<1x32xf32> to vector<12x32xf32>
    %62 = arith.mulf %60, %61 : vector<12x32xf32>
    %63 = vector.broadcast %44 : vector<1x32xf32> to vector<12x32xf32>
    %64 = arith.addf %62, %63 : vector<12x32xf32>
    %65 = arith.truncf %64 : vector<12x32xf32> to vector<12x32xbf16>
    %c0_24 = arith.constant 0 : index
    %c0_25 = arith.constant 0 : index
    %66 = vector.load %arg8[%c0_24, %c0_25] : memref<32x64xbf16, #tpu.memory_space<vmem>>, vector<32x64xbf16>
    %cst_26 = arith.constant dense<0.000000e+00> : vector<12x64xf32>
    %67 = tpu.matmul %65, %66, %cst_26 {dimension_numbers = #tpu.dot_dimension_numbers<[1], [0], [0], [1], [0, 0, 1, 1], [], []>} : vector<12x32xbf16>, vector<32x64xbf16>, vector<12x64xf32> -> vector<12x64xf32>
    %c0_27 = arith.constant 0 : index
    %c0_28 = arith.constant 0 : index
    %68 = vector.load %arg9[%c0_27, %c0_28] : memref<1x64xf32, #tpu.memory_space<vmem>>, vector<1x64xf32>
    %69 = vector.broadcast %68 : vector<1x64xf32> to vector<12x64xf32>
    %70 = arith.addf %67, %69 : vector<12x64xf32>
    %cst_29 = arith.constant 5.000000e-01 : f32
    %71 = vector.broadcast %cst_29 : f32 to vector<12x64xf32>
    %72 = arith.mulf %71, %70 : vector<12x64xf32>
    %cst_30 = arith.constant 4.471500e-02 : f32
    %73 = vector.broadcast %cst_30 : f32 to vector<12x64xf32>
    %74 = arith.mulf %73, %70 : vector<12x64xf32>
    %75 = arith.mulf %74, %70 : vector<12x64xf32>
    %76 = arith.mulf %75, %70 : vector<12x64xf32>
    %77 = arith.addf %70, %76 : vector<12x64xf32>
    %cst_31 = arith.constant 0.797884583 : f32
    %78 = vector.broadcast %cst_31 : f32 to vector<12x64xf32>
    %79 = arith.mulf %78, %77 : vector<12x64xf32>
    %80 = math.tanh %79 : vector<12x64xf32>
    %cst_32 = arith.constant 1.000000e+00 : f32
    %81 = vector.broadcast %cst_32 : f32 to vector<12x64xf32>
    %82 = arith.addf %81, %80 : vector<12x64xf32>
    %83 = arith.mulf %72, %82 : vector<12x64xf32>
    %84 = arith.truncf %83 : vector<12x64xf32> to vector<12x64xbf16>
    %c0_33 = arith.constant 0 : index
    %c0_34 = arith.constant 0 : index
    %85 = vector.load %arg10[%c0_33, %c0_34] : memref<64x32xbf16, #tpu.memory_space<vmem>>, vector<64x32xbf16>
    %cst_35 = arith.constant dense<0.000000e+00> : vector<12x32xf32>
    %86 = tpu.matmul %84, %85, %cst_35 {dimension_numbers = #tpu.dot_dimension_numbers<[1], [0], [0], [1], [0, 0, 1, 1], [], []>} : vector<12x64xbf16>, vector<64x32xbf16>, vector<12x32xf32> -> vector<12x32xf32>
    %c0_36 = arith.constant 0 : index
    %c0_37 = arith.constant 0 : index
    %87 = vector.load %arg11[%c0_36, %c0_37] : memref<1x32xf32, #tpu.memory_space<vmem>>, vector<1x32xf32>
    %88 = vector.broadcast %87 : vector<1x32xf32> to vector<12x32xf32>
    %89 = arith.addf %86, %88 : vector<12x32xf32>
    %90 = arith.addf %64, %89 : vector<12x32xf32>
    %c0_38 = arith.constant 0 : index
    %c0_39 = arith.constant 0 : index
    %91 = vector.load %arg12[%c0_38, %c0_39] : memref<1x32xf32, #tpu.memory_space<vmem>>, vector<1x32xf32>
    %c0_40 = arith.constant 0 : index
    %c0_41 = arith.constant 0 : index
    %92 = vector.load %arg13[%c0_40, %c0_41] : memref<1x32xf32, #tpu.memory_space<vmem>>, vector<1x32xf32>
    %cst_42 = arith.constant dense<0.000000e+00> : vector<12xf32>
    %93 = vector.multi_reduction <add>, %90, %cst_42 [1] : vector<12x32xf32> to vector<12xf32>
    %94 = vector.shape_cast %93 : vector<12xf32> to vector<12x1xf32>
    %cst_43 = arith.constant 3.200000e+01 : f32
    %95 = vector.broadcast %cst_43 : f32 to vector<12x1xf32>
    %96 = arith.divf %94, %95 : vector<12x1xf32>
    %97 = vector.broadcast %96 : vector<12x1xf32> to vector<12x32xf32>
    %98 = arith.subf %90, %97 : vector<12x32xf32>
    %99 = arith.mulf %98, %98 : vector<12x32xf32>
    %cst_44 = arith.constant dense<0.000000e+00> : vector<12xf32>
    %100 = vector.multi_reduction <add>, %99, %cst_44 [1] : vector<12x32xf32> to vector<12xf32>
    %101 = vector.shape_cast %100 : vector<12xf32> to vector<12x1xf32>
    %cst_45 = arith.constant 3.200000e+01 : f32
    %102 = vector.broadcast %cst_45 : f32 to vector<12x1xf32>
    %103 = arith.divf %101, %102 : vector<12x1xf32>
    %cst_46 = arith.constant 9.99999996E-13 : f32
    %104 = vector.broadcast %cst_46 : f32 to vector<12x1xf32>
    %105 = arith.addf %103, %104 : vector<12x1xf32>
    %106 = math.rsqrt %105 : vector<12x1xf32>
    %107 = vector.broadcast %106 : vector<12x1xf32> to vector<12x32xf32>
    %108 = arith.mulf %98, %107 : vector<12x32xf32>
    %109 = vector.broadcast %91 : vector<1x32xf32> to vector<12x32xf32>
    %110 = arith.mulf %108, %109 : vector<12x32xf32>
    %111 = vector.broadcast %92 : vector<1x32xf32> to vector<12x32xf32>
    %112 = arith.addf %110, %111 : vector<12x32xf32>
    %113 = arith.truncf %112 : vector<12x32xf32> to vector<12x32xbf16>
    %c0_47 = arith.constant 0 : index
    %c0_48 = arith.constant 0 : index
    %c0_49 = arith.constant 0 : index
    %114 = vector.load %arg14[%c0_47, %c0_48, %c0_49] : memref<1x12x32xbf16, #tpu.memory_space<vmem>>, vector<1x12x32xbf16>
    %115 = vector.shape_cast %114 : vector<1x12x32xbf16> to vector<12x32xbf16>
    %116 = vector.shape_cast %113 : vector<12x32xbf16> to vector<1x12x32xbf16>
    tpu.vector_store %arg14[%c0_47, %c0_48, %c0_49], %116 {strides = array<i32>} : memref<1x12x32xbf16, #tpu.memory_space<vmem>>, vector<1x12x32xbf16>,
    return
  }
  func.func @transform_0(%arg0: i32) -> (i32, i32, i32) {
    %c0_i32 = arith.constant 0 : i32
    %c0_i32_0 = arith.constant 0 : i32
    %c0_i32_1 = arith.constant 0 : i32
    return %arg0, %c0_i32, %c0_i32_0 : i32, i32, i32
  }
  func.func @transform_1(%arg0: i32) -> (i32, i32) {
    %c0_i32 = arith.constant 0 : i32
    %c0_i32_0 = arith.constant 0 : i32
    %c0_i32_1 = arith.constant 0 : i32
    return %c0_i32, %c0_i32_0 : i32, i32
  }
  func.func @transform_2(%arg0: i32) -> (i32, i32) {
    %c0_i32 = arith.constant 0 : i32
    %c0_i32_0 = arith.constant 0 : i32
    %c0_i32_1 = arith.constant 0 : i32
    return %c0_i32, %c0_i32_0 : i32, i32
  }
  func.func @transform_3(%arg0: i32) -> (i32, i32) {
    %c0_i32 = arith.constant 0 : i32
    %c0_i32_0 = arith.constant 0 : i32
    %c0_i32_1 = arith.constant 0 : i32
    return %c0_i32, %c0_i32_0 : i32, i32
  }
  func.func @transform_4(%arg0: i32) -> (i32, i32) {
    %c0_i32 = arith.constant 0 : i32
    %c0_i32_0 = arith.constant 0 : i32
    %c0_i32_1 = arith.constant 0 : i32
    return %c0_i32, %c0_i32_0 : i32, i32
  }
  func.func @transform_5(%arg0: i32) -> (i32, i32) {
    %c0_i32 = arith.constant 0 : i32
    %c0_i32_0 = arith.constant 0 : i32
    %c0_i32_1 = arith.constant 0 : i32
    return %c0_i32, %c0_i32_0 : i32, i32
  }
  func.func @transform_6(%arg0: i32) -> (i32, i32) {
    %c0_i32 = arith.constant 0 : i32
    %c0_i32_0 = arith.constant 0 : i32
    %c0_i32_1 = arith.constant 0 : i32
    return %c0_i32, %c0_i32_0 : i32, i32
  }
  func.func @transform_7(%arg0: i32) -> (i32, i32) {
    %c0_i32 = arith.constant 0 : i32
    %c0_i32_0 = arith.constant 0 : i32
    %c0_i32_1 = arith.constant 0 : i32
    return %c0_i32, %c0_i32_0 : i32, i32
  }
  func.func @transform_8(%arg0: i32) -> (i32, i32) {
    %c0_i32 = arith.constant 0 : i32
    %c0_i32_0 = arith.constant 0 : i32
    %c0_i32_1 = arith.constant 0 : i32
    return %c0_i32, %c0_i32_0 : i32, i32
  }
  func.func @transform_9(%arg0: i32) -> (i32, i32) {
    %c0_i32 = arith.constant 0 : i32
    %c0_i32_0 = arith.constant 0 : i32
    %c0_i32_1 = arith.constant 0 : i32
    return %c0_i32, %c0_i32_0 : i32, i32
  }
  func.func @transform_10(%arg0: i32) -> (i32, i32) {
    %c0_i32 = arith.constant 0 : i32
    %c0_i32_0 = arith.constant 0 : i32
    %c0_i32_1 = arith.constant 0 : i32
    return %c0_i32, %c0_i32_0 : i32, i32
  }
  func.func @transform_11(%arg0: i32) -> (i32, i32) {
    %c0_i32 = arith.constant 0 : i32
    %c0_i32_0 = arith.constant 0 : i32
    %c0_i32_1 = arith.constant 0 : i32
    return %c0_i32, %c0_i32_0 : i32, i32
  }
  func.func @transform_12(%arg0: i32) -> (i32, i32) {
    %c0_i32 = arith.constant 0 : i32
    %c0_i32_0 = arith.constant 0 : i32
    %c0_i32_1 = arith.constant 0 : i32
    return %c0_i32, %c0_i32_0 : i32, i32
  }
  func.func @transform_13(%arg0: i32) -> (i32, i32, i32) {
    %c0_i32 = arith.constant 0 : i32
    %c0_i32_0 = arith.constant 0 : i32
    %c0_i32_1 = arith.constant 0 : i32
    return %arg0, %c0_i32, %c0_i32_0 : i32, i32, i32
  }
}

</mosaic_0001>

<llo_original>
// kernel: tpu_custom_call.1
$region0: #{tpu_custom_call.1}
  #allocation0 [shape = 'u32[]', space=smem, size = 0x4, offset = 0x4, fixed_abs, tag = 'smem constant byte address 0x4 - core index']
  #allocation1 [shape = 'u32[144,128]{1,0:T(1,128)}', space=vmem, size = 0x12000, scoped, tag = 'internal scratch']
  %s0 = inlined_call_operand.hbm [shape: bf16[2,12,32], index: 0, kind: input, shape index: {}]
  %s1 = inlined_call_operand.hbm [shape: bf16[32,96], index: 1, kind: input, shape index: {}]
  %s2 = inlined_call_operand.hbm [shape: f32[1,96], index: 2, kind: input, shape index: {}]
  %s3 = inlined_call_operand.hbm [shape: bf16[32,32], index: 3, kind: input, shape index: {}]
  %s4 = inlined_call_operand.hbm [shape: f32[1,32], index: 4, kind: input, shape index: {}]
  %s5 = inlined_call_operand.hbm [shape: f32[1,32], index: 5, kind: input, shape index: {}]
  %s6 = inlined_call_operand.hbm [shape: f32[1,32], index: 6, kind: input, shape index: {}]
  %s7 = inlined_call_operand.hbm [shape: bf16[32,64], index: 7, kind: input, shape index: {}]
  %s8 = inlined_call_operand.hbm [shape: f32[1,64], index: 8, kind: input, shape index: {}]
  %s9 = inlined_call_operand.hbm [shape: bf16[64,32], index: 9, kind: input, shape index: {}]
  %s10 = inlined_call_operand.hbm [shape: f32[1,32], index: 10, kind: input, shape index: {}]
  %s11 = inlined_call_operand.hbm [shape: f32[1,32], index: 11, kind: input, shape index: {}]
  %s12 = inlined_call_operand.hbm [shape: f32[1,32], index: 12, kind: input, shape index: {}]
  %s13 = inlined_call_operand.hbm [shape: bf16[2,12,32], index: 13, kind: output, shape index: {}]
  %s14 = sld [smem:[#allocation0]]
  $region137: #{tpu_custom_call.1} parent=0
    _
  %s16 = ssub.s32 1, %s14
  %s17 = scalar_select 0, %s16, %s14
  $region1: #{tpu_custom_call.1} parent=0
    #allocation2 [shape = 'u8[8192]{0}', space=vmem, size = 0x2000, scoped, tag = 'input window, operand 0']
    #allocation3 [shape = 's32[2]{0}', space=sflag, size = 0x8, scoped, tag = 'scoped memory for tpu_custom_call.1']
    #allocation4 [shape = 's32[2]{0}', space=sflag, size = 0x8, scoped, tag = 'scoped memory for tpu_custom_call.1']
    #allocation5 [shape = 'u8[8192]{0}', space=vmem, size = 0x2000, scoped, tag = 'input window, operand 1, single buffered']
    #allocation6 [shape = 's32[1]{0}', space=sflag, size = 0x4, scoped, tag = 'scoped memory for tpu_custom_call.1']
    #allocation7 [shape = 'u8[512]{0}', space=vmem, size = 0x400, scoped, tag = 'input window, operand 2, single buffered']
    #allocation8 [shape = 'u8[8192]{0}', space=vmem, size = 0x2000, scoped, tag = 'input window, operand 3, single buffered']
    #allocation9 [shape = 's32[1]{0}', space=sflag, size = 0x4, scoped, tag = 'scoped memory for tpu_custom_call.1']
    #allocation10 [shape = 'u8[512]{0}', space=vmem, size = 0x400, scoped, tag = 'input window, operand 4, single buffered']
    #allocation11 [shape = 'u8[512]{0}', space=vmem, size = 0x400, scoped, tag = 'input window, operand 5, single buffered']
    #allocation12 [shape = 's32[1]{0}', space=sflag, size = 0x4, scoped, tag = 'scoped memory for tpu_custom_call.1']
    #allocation13 [shape = 'u8[512]{0}', space=vmem, size = 0x400, scoped, tag = 'input window, operand 6, single buffered']
    #allocation14 [shape = 'u8[8192]{0}', space=vmem, size = 0x2000, scoped, tag = 'input window, operand 7, single buffered']
    #allocation15 [shape = 's32[1]{0}', space=sflag, size = 0x4, scoped, tag = 'scoped memory for tpu_custom_call.1']
    #allocation16 [shape = 'u8[512]{0}', space=vmem, size = 0x400, scoped, tag = 'input window, operand 8, single buffered']
    #allocation17 [shape = 'u8[16384]{0}', space=vmem, size = 0x4000, scoped, tag = 'input window, operand 9, single buffered']
    #allocation18 [shape = 's32[1]{0}', space=sflag, size = 0x4, scoped, tag = 'scoped memory for tpu_custom_call.1']
    #allocation19 [shape = 'u8[512]{0}', space=vmem, size = 0x400, scoped, tag = 'input window, operand 10, single buffered']
    #allocation20 [shape = 'u8[512]{0}', space=vmem, size = 0x400, scoped, tag = 'input window, operand 11, single buffered']
    #allocation21 [shape = 's32[1]{0}', space=sflag, size = 0x4, scoped, tag = 'scoped memory for tpu_custom_call.1']
    #allocation22 [shape = 'u8[512]{0}', space=vmem, size = 0x400, scoped, tag = 'input window, operand 12, single buffered']
    #allocation23 [shape = 'u8[8192]{0}', space=vmem, size = 0x2000, scoped, tag = 'output window, operand 0']
    %18 = vsyncpa [#allocation3], 0
    %s19 = scalar_lea.sflag [#allocation3], 1
    %20 = vsyncpa %s19, 0
    %21 = vsyncpa [#allocation6], 0
    %22 = vsyncpa [#allocation9], 0
    %23 = vsyncpa [#allocation12], 0
    %24 = vsyncpa [#allocation15], 0
    %25 = vsyncpa [#allocation18], 0
    %26 = vsyncpa [#allocation21], 0
    %27 = vsyncpa [#allocation4], 0
    %s28 = scalar_lea.sflag [#allocation4], 1
    %29 = vsyncpa %s28, 0
    loop: start=0, step=1, limit=4
    $region2: #{tpu_custom_call.1} parent=1 // loop_pre_header
      _
    $region3: #{tpu_custom_call.1} parent=1 // loop_header
      %s31 = sphi 0, %s35
      %p32 = scmp.ge.s32.totalorder %s31, 4
      %s41 = sphi 0, %s43
      %s44 = sphi 0, %s41
      %s45 = sphi 0, %s44
      %s61 = sphi 0, %s45
      %s65 = sphi 0, %s65
      %s67 = sphi 0, %s65
      %s68 = sphi 0, %s67
      %s82 = sphi 0, %s68
      %s86 = sphi 0, %s86
      %s88 = sphi 0, %s86
      %s89 = sphi 0, %s88
      %s103 = sphi 0, %s89
      %s107 = sphi 0, %s107
      %s109 = sphi 0, %s107
      %s110 = sphi 0, %s109
      %s124 = sphi 0, %s110
      %s128 = sphi 0, %s128
      %s130 = sphi 0, %s128
      %s131 = sphi 0, %s130
      %s145 = sphi 0, %s131
      %s149 = sphi 0, %s149
      %s151 = sphi 0, %s149
      %s152 = sphi 0, %s151
      %s166 = sphi 0, %s152
      %s170 = sphi 0, %s170
      %s172 = sphi 0, %s170
      %s173 = sphi 0, %s172
      %s187 = sphi 0, %s173
      %s191 = sphi 0, %s191
      %s193 = sphi 0, %s191
      %s194 = sphi 0, %s193
      %s208 = sphi 0, %s194
      %s212 = sphi 0, %s212
      %s214 = sphi 0, %s212
      %s215 = sphi 0, %s214
      %s229 = sphi 0, %s215
      %s233 = sphi 0, %s233
      %s235 = sphi 0, %s233
      %s236 = sphi 0, %s235
      %s250 = sphi 0, %s236
      %s254 = sphi 0, %s254
      %s256 = sphi 0, %s254
      %s257 = sphi 0, %s256
      %s271 = sphi 0, %s257
      %s275 = sphi 0, %s275
      %s277 = sphi 0, %s275
      %s278 = sphi 0, %s277
      %s292 = sphi 0, %s278
      %s296 = sphi 0, %s296
      %s298 = sphi 0, %s296
      %s299 = sphi 0, %s298
      %s313 = sphi 0, %s299
      %s319 = sphi 0, %s321
      %s322 = sphi 0, %s319
      %s323 = sphi 0, %s322
      %s339 = sphi 0, %s323
    $region4: #{tpu_custom_call.1} parent=1 // loop_header_branch
      %34 = sbr.rel (%p32) target = $region8
    $region5: #{tpu_custom_call.1} parent=1 // loop_body
      %s36 = ssub.s32 %s31, 1
      %s37 = ssub.s32 %s31, 2
      %s38 = sadd.s32 %s31, 1
      %s39 = ssub.s32 %s31, %s38
      %p40 = scmp.eq.s32.totalorder %s39, 0
      %s42 = sadd.s32 %s41, 1
      %s43 = scalar_select %p40, %s41, %s42
      %p46 = pneg %p40
      %p47 = scmp.eq.s32.totalorder %s31, 1
      %p48 = por %p46, %p47
      %p49 = scmp.ne.s32.totalorder %s41, %s44
      %p50 = scmp.eq.s32.totalorder %s31, 0
      %p51 = por %p49, %p50
      %p52 = scmp.ne.s32.totalorder %s41, %s44
      %p53 = scmp.eq.s32.totalorder %s36, 1
      %p54 = por %p52, %p53
      %p55 = scmp.ne.s32.totalorder %s44, %s45
      %p56 = scmp.eq.s32.totalorder %s36, 0
      %p57 = por %p55, %p56
      %p58 = scmp.ne.s32.totalorder %s44, %s45
      %p59 = scmp.eq.s32.totalorder %s37, 1
      %p60 = por %p58, %p59
      %p62 = scmp.ne.s32.totalorder %s45, %s61
      %p63 = scmp.eq.s32.totalorder %s37, 0
      %p64 = por %p62, %p63
      %s66 = sadd.s32 %s65, 1
      %p69 = scmp.eq.s32.totalorder %s31, 1
      %p70 = scmp.ne.s32.totalorder %s65, %s67
      %p71 = scmp.eq.s32.totalorder %s31, 0
      %p72 = por %p70, %p71
      %p73 = scmp.ne.s32.totalorder %s65, %s67
      %p74 = scmp.eq.s32.totalorder %s36, 1
      %p75 = por %p73, %p74
      %p76 = scmp.ne.s32.totalorder %s67, %s68
      %p77 = scmp.eq.s32.totalorder %s36, 0
      %p78 = por %p76, %p77
      %p79 = scmp.ne.s32.totalorder %s67, %s68
      %p80 = scmp.eq.s32.totalorder %s37, 1
      %p81 = por %p79, %p80
      %p83 = scmp.ne.s32.totalorder %s68, %s82
      %p84 = scmp.eq.s32.totalorder %s37, 0
      %p85 = por %p83, %p84
      %s87 = sadd.s32 %s86, 1
      %p90 = scmp.eq.s32.totalorder %s31, 1
      %p91 = scmp.ne.s32.totalorder %s86, %s88
      %p92 = scmp.eq.s32.totalorder %s31, 0
      %p93 = por %p91, %p92
      %p94 = scmp.ne.s32.totalorder %s86, %s88
      %p95 = scmp.eq.s32.totalorder %s36, 1
      %p96 = por %p94, %p95
      %p97 = scmp.ne.s32.totalorder %s88, %s89
      %p98 = scmp.eq.s32.totalorder %s36, 0
      %p99 = por %p97, %p98
      %p100 = scmp.ne.s32.totalorder %s88, %s89
      %p101 = scmp.eq.s32.totalorder %s37, 1
      %p102 = por %p100, %p101
      %p104 = scmp.ne.s32.totalorder %s89, %s103
      %p105 = scmp.eq.s32.totalorder %s37, 0
      %p106 = por %p104, %p105
      %s108 = sadd.s32 %s107, 1
      %p111 = scmp.eq.s32.totalorder %s31, 1
      %p112 = scmp.ne.s32.totalorder %s107, %s109
      %p113 = scmp.eq.s32.totalorder %s31, 0
      %p114 = por %p112, %p113
      %p115 = scmp.ne.s32.totalorder %s107, %s109
      %p116 = scmp.eq.s32.totalorder %s36, 1
      %p117 = por %p115, %p116
      %p118 = scmp.ne.s32.totalorder %s109, %s110
      %p119 = scmp.eq.s32.totalorder %s36, 0
      %p120 = por %p118, %p119
      %p121 = scmp.ne.s32.totalorder %s109, %s110
      %p122 = scmp.eq.s32.totalorder %s37, 1
      %p123 = por %p121, %p122
      %p125 = scmp.ne.s32.totalorder %s110, %s124
      %p126 = scmp.eq.s32.totalorder %s37, 0
      %p127 = por %p125, %p126
      %s129 = sadd.s32 %s128, 1
      %p132 = scmp.eq.s32.totalorder %s31, 1
      %p133 = scmp.ne.s32.totalorder %s128, %s130
      %p134 = scmp.eq.s32.totalorder %s31, 0
      %p135 = por %p133, %p134
      %p136 = scmp.ne.s32.totalorder %s128, %s130
      %p137 = scmp.eq.s32.totalorder %s36, 1
      %p138 = por %p136, %p137
      %p139 = scmp.ne.s32.totalorder %s130, %s131
      %p140 = scmp.eq.s32.totalorder %s36, 0
      %p141 = por %p139, %p140
      %p142 = scmp.ne.s32.totalorder %s130, %s131
      %p143 = scmp.eq.s32.totalorder %s37, 1
      %p144 = por %p142, %p143
      %p146 = scmp.ne.s32.totalorder %s131, %s145
      %p147 = scmp.eq.s32.totalorder %s37, 0
      %p148 = por %p146, %p147
      %s150 = sadd.s32 %s149, 1
      %p153 = scmp.eq.s32.totalorder %s31, 1
      %p154 = scmp.ne.s32.totalorder %s149, %s151
      %p155 = scmp.eq.s32.totalorder %s31, 0
      %p156 = por %p154, %p155
      %p157 = scmp.ne.s32.totalorder %s149, %s151
      %p158 = scmp.eq.s32.totalorder %s36, 1
      %p159 = por %p157, %p158
      %p160 = scmp.ne.s32.totalorder %s151, %s152
      %p161 = scmp.eq.s32.totalorder %s36, 0
      %p162 = por %p160, %p161
      %p163 = scmp.ne.s32.totalorder %s151, %s152
      %p164 = scmp.eq.s32.totalorder %s37, 1
      %p165 = por %p163, %p164
      %p167 = scmp.ne.s32.totalorder %s152, %s166
      %p168 = scmp.eq.s32.totalorder %s37, 0
      %p169 = por %p167, %p168
      %s171 = sadd.s32 %s170, 1
      %p174 = scmp.eq.s32.totalorder %s31, 1
      %p175 = scmp.ne.s32.totalorder %s170, %s172
      %p176 = scmp.eq.s32.totalorder %s31, 0
      %p177 = por %p175, %p176
      %p178 = scmp.ne.s32.totalorder %s170, %s172
      %p179 = scmp.eq.s32.totalorder %s36, 1
      %p180 = por %p178, %p179
      %p181 = scmp.ne.s32.totalorder %s172, %s173
      %p182 = scmp.eq.s32.totalorder %s36, 0
      %p183 = por %p181, %p182
      %p184 = scmp.ne.s32.totalorder %s172, %s173
      %p185 = scmp.eq.s32.totalorder %s37, 1
      %p186 = por %p184, %p185
      %p188 = scmp.ne.s32.totalorder %s173, %s187
      %p189 = scmp.eq.s32.totalorder %s37, 0
      %p190 = por %p188, %p189
      %s192 = sadd.s32 %s191, 1
      %p195 = scmp.eq.s32.totalorder %s31, 1
      %p196 = scmp.ne.s32.totalorder %s191, %s193
      %p197 = scmp.eq.s32.totalorder %s31, 0
      %p198 = por %p196, %p197
      %p199 = scmp.ne.s32.totalorder %s191, %s193
      %p200 = scmp.eq.s32.totalorder %s36, 1
      %p201 = por %p199, %p200
      %p202 = scmp.ne.s32.totalorder %s193, %s194
      %p203 = scmp.eq.s32.totalorder %s36, 0
      %p204 = por %p202, %p203
      %p205 = scmp.ne.s32.totalorder %s193, %s194
      %p206 = scmp.eq.s32.totalorder %s37, 1
      %p207 = por %p205, %p206
      %p209 = scmp.ne.s32.totalorder %s194, %s208
      %p210 = scmp.eq.s32.totalorder %s37, 0
      %p211 = por %p209, %p210
      %s213 = sadd.s32 %s212, 1
      %p216 = scmp.eq.s32.totalorder %s31, 1
      %p217 = scmp.ne.s32.totalorder %s212, %s214
      %p218 = scmp.eq.s32.totalorder %s31, 0
      %p219 = por %p217, %p218
      %p220 = scmp.ne.s32.totalorder %s212, %s214
      %p221 = scmp.eq.s32.totalorder %s36, 1
      %p222 = por %p220, %p221
      %p223 = scmp.ne.s32.totalorder %s214, %s215
      %p224 = scmp.eq.s32.totalorder %s36, 0
      %p225 = por %p223, %p224
      %p226 = scmp.ne.s32.totalorder %s214, %s215
      %p227 = scmp.eq.s32.totalorder %s37, 1
      %p228 = por %p226, %p227
      %p230 = scmp.ne.s32.totalorder %s215, %s229
      %p231 = scmp.eq.s32.totalorder %s37, 0
      %p232 = por %p230, %p231
      %s234 = sadd.s32 %s233, 1
      %p237 = scmp.eq.s32.totalorder %s31, 1
      %p238 = scmp.ne.s32.totalorder %s233, %s235
      %p239 = scmp.eq.s32.totalorder %s31, 0
      %p240 = por %p238, %p239
      %p241 = scmp.ne.s32.totalorder %s233, %s235
      %p242 = scmp.eq.s32.totalorder %s36, 1
      %p243 = por %p241, %p242
      %p244 = scmp.ne.s32.totalorder %s235, %s236
      %p245 = scmp.eq.s32.totalorder %s36, 0
      %p246 = por %p244, %p245
      %p247 = scmp.ne.s32.totalorder %s235, %s236
      %p248 = scmp.eq.s32.totalorder %s37, 1
      %p249 = por %p247, %p248
      %p251 = scmp.ne.s32.totalorder %s236, %s250
      %p252 = scmp.eq.s32.totalorder %s37, 0
      %p253 = por %p251, %p252
      %s255 = sadd.s32 %s254, 1
      %p258 = scmp.eq.s32.totalorder %s31, 1
      %p259 = scmp.ne.s32.totalorder %s254, %s256
      %p260 = scmp.eq.s32.totalorder %s31, 0
      %p261 = por %p259, %p260
      %p262 = scmp.ne.s32.totalorder %s254, %s256
      %p263 = scmp.eq.s32.totalorder %s36, 1
      %p264 = por %p262, %p263
      %p265 = scmp.ne.s32.totalorder %s256, %s257
      %p266 = scmp.eq.s32.totalorder %s36, 0
      %p267 = por %p265, %p266
      %p268 = scmp.ne.s32.totalorder %s256, %s257
      %p269 = scmp.eq.s32.totalorder %s37, 1
      %p270 = por %p268, %p269
      %p272 = scmp.ne.s32.totalorder %s257, %s271
      %p273 = scmp.eq.s32.totalorder %s37, 0
      %p274 = por %p272, %p273
      %s276 = sadd.s32 %s275, 1
      %p279 = scmp.eq.s32.totalorder %s31, 1
      %p280 = scmp.ne.s32.totalorder %s275, %s277
      %p281 = scmp.eq.s32.totalorder %s31, 0
      %p282 = por %p280, %p281
      %p283 = scmp.ne.s32.totalorder %s275, %s277
      %p284 = scmp.eq.s32.totalorder %s36, 1
      %p285 = por %p283, %p284
      %p286 = scmp.ne.s32.totalorder %s277, %s278
      %p287 = scmp.eq.s32.totalorder %s36, 0
      %p288 = por %p286, %p287
      %p289 = scmp.ne.s32.totalorder %s277, %s278
      %p290 = scmp.eq.s32.totalorder %s37, 1
      %p291 = por %p289, %p290
      %p293 = scmp.ne.s32.totalorder %s278, %s292
      %p294 = scmp.eq.s32.totalorder %s37, 0
      %p295 = por %p293, %p294
      %s297 = sadd.s32 %s296, 1
      %p300 = scmp.eq.s32.totalorder %s31, 1
      %p301 = scmp.ne.s32.totalorder %s296, %s298
      %p302 = scmp.eq.s32.totalorder %s31, 0
      %p303 = por %p301, %p302
      %p304 = scmp.ne.s32.totalorder %s296, %s298
      %p305 = scmp.eq.s32.totalorder %s36, 1
      %p306 = por %p304, %p305
      %p307 = scmp.ne.s32.totalorder %s298, %s299
      %p308 = scmp.eq.s32.totalorder %s36, 0
      %p309 = por %p307, %p308
      %p310 = scmp.ne.s32.totalorder %s298, %s299
      %p311 = scmp.eq.s32.totalorder %s37, 1
      %p312 = por %p310, %p311
      %p314 = scmp.ne.s32.totalorder %s299, %s313
      %p315 = scmp.eq.s32.totalorder %s37, 0
      %p316 = por %p314, %p315
      %s317 = ssub.s32 %s31, %s38
      %p318 = scmp.eq.s32.totalorder %s317, 0
      %s320 = sadd.s32 %s319, 1
      %s321 = scalar_select %p318, %s319, %s320
      %p324 = pneg %p318
      %p325 = scmp.eq.s32.totalorder %s31, 1
      %p326 = por %p324, %p325
      %p327 = scmp.ne.s32.totalorder %s319, %s322
      %p328 = scmp.eq.s32.totalorder %s31, 0
      %p329 = por %p327, %p328
      %p330 = scmp.ne.s32.totalorder %s319, %s322
      %p331 = scmp.eq.s32.totalorder %s36, 1
      %p332 = por %p330, %p331
      %p333 = scmp.ne.s32.totalorder %s322, %s323
      %p334 = scmp.eq.s32.totalorder %s36, 0
      %p335 = por %p333, %p334
      %p336 = scmp.ne.s32.totalorder %s322, %s323
      %p337 = scmp.eq.s32.totalorder %s37, 1
      %p338 = por %p336, %p337
      %p340 = scmp.ne.s32.totalorder %s323, %s339
      %p341 = scmp.eq.s32.totalorder %s37, 0
      %p342 = por %p340, %p341
      %p343 = scmp.le.s32.totalorder 1, %s31
      %p344 = scmp.lt.s32.totalorder %s31, 3
      %p345 = pnand %p343, %p344
      %p346 = pneg %p345
      // Predicated region
      $region9: #{tpu_custom_call.1} parent=5 // pred_check
        _
      $region10: #{tpu_custom_call.1} parent=5 // pred_check_branch
        %348 = sbr.rel (%p345) target = $region12
      $region11: #{tpu_custom_call.1} parent=5 // pred_region
        %s349 = ssub.s32 %s31, 1
        // Predicated region
        $region13: #{tpu_custom_call.1} parent=11 // pred_check
          %p350 = pneg %p78
        $region14: #{tpu_custom_call.1} parent=11 // pred_check_branch
          %352 = sbr.rel (%p350) target = $region16
        $region15: #{tpu_custom_call.1} parent=11 // pred_region
          %s354 = ssub.s32 256, 256
          %355 = vsyncadd [#allocation6], %s354
          %s356 = sshll.u32 [#allocation5], 4
          %s357 = int_to_ptr.vmem [resolvable:$true] %s356
          %362 = dma.hbm_to_vmem [thread:$0]  %s1, 256, %s357, [#allocation6], 64, 64, 4
        $region16: #{tpu_custom_call.1} parent=11 // pred_fallthru
          _
        // Predicated region
        $region17: #{tpu_custom_call.1} parent=11 // pred_check
          %p363 = pneg %p99
        $region18: #{tpu_custom_call.1} parent=11 // pred_check_branch
          %365 = sbr.rel (%p363) target = $region20
        $region19: #{tpu_custom_call.1} parent=11 // pred_region
          %s367 = ssub.s32 16, 16
          %368 = vsyncadd [#allocation6], %s367
          %s370 = sshll.u32 [#allocation7], 4
          %s371 = int_to_ptr.vmem [resolvable:$true] %s370
          %373 = dma.hbm_to_vmem [thread:$0]  %s2, 16, %s371, [#allocation6]
        $region20: #{tpu_custom_call.1} parent=11 // pred_fallthru
          _
        // Predicated region
        $region21: #{tpu_custom_call.1} parent=11 // pred_check
          %p374 = pneg %p120
        $region22: #{tpu_custom_call.1} parent=11 // pred_check_branch
          %376 = sbr.rel (%p374) target = $region24
        $region23: #{tpu_custom_call.1} parent=11 // pred_region
          %s378 = ssub.s32 256, 256
          %379 = vsyncadd [#allocation9], %s378
          %s380 = sshll.u32 [#allocation8], 4
          %s381 = int_to_ptr.vmem [resolvable:$true] %s380
          %386 = dma.hbm_to_vmem [thread:$0]  %s3, 256, %s381, [#allocation9], 64, 64, 4
        $region24: #{tpu_custom_call.1} parent=11 // pred_fallthru
          _
        // Predicated region
        $region25: #{tpu_custom_call.1} parent=11 // pred_check
          %p387 = pneg %p141
        $region26: #{tpu_custom_call.1} parent=11 // pred_check_branch
          %389 = sbr.rel (%p387) target = $region28
        $region27: #{tpu_custom_call.1} parent=11 // pred_region
          %s391 = ssub.s32 16, 16
          %392 = vsyncadd [#allocation9], %s391
          %s394 = sshll.u32 [#allocation10], 4
          %s395 = int_to_ptr.vmem [resolvable:$true] %s394
          %397 = dma.hbm_to_vmem [thread:$0]  %s4, 16, %s395, [#allocation9]
        $region28: #{tpu_custom_call.1} parent=11 // pred_fallthru
          _
        // Predicated region
        $region29: #{tpu_custom_call.1} parent=11 // pred_check
          %p398 = pneg %p162
        $region30: #{tpu_custom_call.1} parent=11 // pred_check_branch
          %400 = sbr.rel (%p398) target = $region32
        $region31: #{tpu_custom_call.1} parent=11 // pred_region
          %s402 = ssub.s32 16, 16
          %403 = vsyncadd [#allocation12], %s402
          %s405 = sshll.u32 [#allocation11], 4
          %s406 = int_to_ptr.vmem [resolvable:$true] %s405
          %408 = dma.hbm_to_vmem [thread:$0]  %s5, 16, %s406, [#allocation12]
        $region32: #{tpu_custom_call.1} parent=11 // pred_fallthru
          _
        // Predicated region
        $region33: #{tpu_custom_call.1} parent=11 // pred_check
          %p409 = pneg %p183
        $region34: #{tpu_custom_call.1} parent=11 // pred_check_branch
          %411 = sbr.rel (%p409) target = $region36
        $region35: #{tpu_custom_call.1} parent=11 // pred_region
          %s413 = ssub.s32 16, 16
          %414 = vsyncadd [#allocation12], %s413
          %s416 = sshll.u32 [#allocation13], 4
          %s417 = int_to_ptr.vmem [resolvable:$true] %s416
          %419 = dma.hbm_to_vmem [thread:$0]  %s6, 16, %s417, [#allocation12]
        $region36: #{tpu_custom_call.1} parent=11 // pred_fallthru
          _
        // Predicated region
        $region37: #{tpu_custom_call.1} parent=11 // pred_check
          %p420 = pneg %p204
        $region38: #{tpu_custom_call.1} parent=11 // pred_check_branch
          %422 = sbr.rel (%p420) target = $region40
        $region39: #{tpu_custom_call.1} parent=11 // pred_region
          %s424 = ssub.s32 256, 256
          %425 = vsyncadd [#allocation15], %s424
          %s426 = sshll.u32 [#allocation14], 4
          %s427 = int_to_ptr.vmem [resolvable:$true] %s426
          %432 = dma.hbm_to_vmem [thread:$0]  %s7, 256, %s427, [#allocation15], 64, 64, 4
        $region40: #{tpu_custom_call.1} parent=11 // pred_fallthru
          _
        // Predicated region
        $region41: #{tpu_custom_call.1} parent=11 // pred_check
          %p433 = pneg %p225
        $region42: #{tpu_custom_call.1} parent=11 // pred_check_branch
          %435 = sbr.rel (%p433) target = $region44
        $region43: #{tpu_custom_call.1} parent=11 // pred_region
          %s437 = ssub.s32 16, 16
          %438 = vsyncadd [#allocation15], %s437
          %s440 = sshll.u32 [#allocation16], 4
          %s441 = int_to_ptr.vmem [resolvable:$true] %s440
          %443 = dma.hbm_to_vmem [thread:$0]  %s8, 16, %s441, [#allocation15]
        $region44: #{tpu_custom_call.1} parent=11 // pred_fallthru
          _
        // Predicated region
        $region45: #{tpu_custom_call.1} parent=11 // pred_check
          %p444 = pneg %p246
        $region46: #{tpu_custom_call.1} parent=11 // pred_check_branch
          %446 = sbr.rel (%p444) target = $region48
        $region47: #{tpu_custom_call.1} parent=11 // pred_region
          %s448 = ssub.s32 512, 512
          %449 = vsyncadd [#allocation18], %s448
          %s450 = sshll.u32 [#allocation17], 4
          %s451 = int_to_ptr.vmem [resolvable:$true] %s450
          %456 = dma.hbm_to_vmem [thread:$0]  %s9, 512, %s451, [#allocation18], 64, 64, 4
        $region48: #{tpu_custom_call.1} parent=11 // pred_fallthru
          _
        // Predicated region
        $region49: #{tpu_custom_call.1} parent=11 // pred_check
          %p457 = pneg %p267
        $region50: #{tpu_custom_call.1} parent=11 // pred_check_branch
          %459 = sbr.rel (%p457) target = $region52
        $region51: #{tpu_custom_call.1} parent=11 // pred_region
          %s461 = ssub.s32 16, 16
          %462 = vsyncadd [#allocation18], %s461
          %s464 = sshll.u32 [#allocation19], 4
          %s465 = int_to_ptr.vmem [resolvable:$true] %s464
          %467 = dma.hbm_to_vmem [thread:$0]  %s10, 16, %s465, [#allocation18]
        $region52: #{tpu_custom_call.1} parent=11 // pred_fallthru
          _
        // Predicated region
        $region53: #{tpu_custom_call.1} parent=11 // pred_check
          %p468 = pneg %p288
        $region54: #{tpu_custom_call.1} parent=11 // pred_check_branch
          %470 = sbr.rel (%p468) target = $region56
        $region55: #{tpu_custom_call.1} parent=11 // pred_region
          %s472 = ssub.s32 16, 16
          %473 = vsyncadd [#allocation21], %s472
          %s475 = sshll.u32 [#allocation20], 4
          %s476 = int_to_ptr.vmem [resolvable:$true] %s475
          %478 = dma.hbm_to_vmem [thread:$0]  %s11, 16, %s476, [#allocation21]
        $region56: #{tpu_custom_call.1} parent=11 // pred_fallthru
          _
        // Predicated region
        $region57: #{tpu_custom_call.1} parent=11 // pred_check
          %p479 = pneg %p309
        $region58: #{tpu_custom_call.1} parent=11 // pred_check_branch
          %481 = sbr.rel (%p479) target = $region60
        $region59: #{tpu_custom_call.1} parent=11 // pred_region
          %s483 = ssub.s32 16, 16
          %484 = vsyncadd [#allocation21], %s483
          %s486 = sshll.u32 [#allocation22], 4
          %s487 = int_to_ptr.vmem [resolvable:$true] %s486
          %489 = dma.hbm_to_vmem [thread:$0]  %s12, 16, %s487, [#allocation21]
        $region60: #{tpu_custom_call.1} parent=11 // pred_fallthru
          _
      $region12: #{tpu_custom_call.1} parent=5 // pred_fallthru
        _
      %p490 = scmp.lt.s32.totalorder %s31, 2
      // Predicated region
      $region61: #{tpu_custom_call.1} parent=5 // pred_check
        %p491 = pneg %p490
      $region62: #{tpu_custom_call.1} parent=5 // pred_check_branch
        %493 = sbr.rel (%p491) target = $region64
      $region63: #{tpu_custom_call.1} parent=5 // pred_region
        // Predicated region
        $region65: #{tpu_custom_call.1} parent=63 // pred_check
          %p494 = pneg %p51
        $region66: #{tpu_custom_call.1} parent=63 // pred_check_branch
          %496 = sbr.rel (%p494) target = $region68
        $region67: #{tpu_custom_call.1} parent=63 // pred_region
          %s497 = sand.u32 %s41, 1
          %s498 = scalar_lea.sflag [#allocation3], %s497
          %s499 = sand.u32 %s41, 1
          %s500 = smul.addr %s499, 8
          %s501 = scalar_lea.vmem [#allocation2], %s500
          %s503 = ssub.s32 128, 128
          %504 = vsyncadd %s498, %s503
          %s505 = smul.addr %s31, 2
          %s506 = smul.addr %s505, 64
          %s507 = scalar_lea.hbm %s0, %s506
          %s508 = sshll.u32 %s501, 4
          %s509 = int_to_ptr.vmem [resolvable:$true] %s508
          %514 = dma.hbm_to_vmem [thread:$0]  %s507, 128, %s509, %s498, 64, 64, 4
        $region68: #{tpu_custom_call.1} parent=63 // pred_fallthru
          _
      $region64: #{tpu_custom_call.1} parent=5 // pred_fallthru
        _
      %p515 = scmp.le.s32.totalorder 1, %s31
      %p516 = scmp.lt.s32.totalorder %s31, 3
      %p517 = pnand %p515, %p516
      %p518 = pneg %p517
      // Predicated region
      $region69: #{tpu_custom_call.1} parent=5 // pred_check
        _
      $region70: #{tpu_custom_call.1} parent=5 // pred_check_branch
        %520 = sbr.rel (%p517) target = $region72
      $region71: #{tpu_custom_call.1} parent=5 // pred_region
        %s521 = ssub.s32 %s31, 1
        %s522 = sand.u32 %s44, 1
        %s523 = scalar_lea.sflag [#allocation3], %s522
        %s524 = sand.u32 %s44, 1
        %s525 = smul.addr %s524, 8
        %s526 = scalar_lea.vmem [#allocation2], %s525
        // Predicated region
        $region73: #{tpu_custom_call.1} parent=71 // pred_check
          %p527 = pneg %p57
        $region74: #{tpu_custom_call.1} parent=71 // pred_check_branch
          %529 = sbr.rel (%p527) target = $region76
        $region75: #{tpu_custom_call.1} parent=71 // pred_region
          %530 = dma.done %s523, 128
        $region76: #{tpu_custom_call.1} parent=71 // pred_fallthru
          _
        // Predicated region
        $region77: #{tpu_custom_call.1} parent=71 // pred_check
          %p531 = pneg %p78
        $region78: #{tpu_custom_call.1} parent=71 // pred_check_branch
          %533 = sbr.rel (%p531) target = $region80
        $region79: #{tpu_custom_call.1} parent=71 // pred_region
          %534 = dma.done [#allocation6], 256
        $region80: #{tpu_custom_call.1} parent=71 // pred_fallthru
          _
        // Predicated region
        $region81: #{tpu_custom_call.1} parent=71 // pred_check
          %p535 = pneg %p99
        $region82: #{tpu_custom_call.1} parent=71 // pred_check_branch
          %537 = sbr.rel (%p535) target = $region84
        $region83: #{tpu_custom_call.1} parent=71 // pred_region
          %538 = dma.done [#allocation6], 16
        $region84: #{tpu_custom_call.1} parent=71 // pred_fallthru
          _
        // Predicated region
        $region85: #{tpu_custom_call.1} parent=71 // pred_check
          %p539 = pneg %p120
        $region86: #{tpu_custom_call.1} parent=71 // pred_check_branch
          %541 = sbr.rel (%p539) target = $region88
        $region87: #{tpu_custom_call.1} parent=71 // pred_region
          %542 = dma.done [#allocation9], 256
        $region88: #{tpu_custom_call.1} parent=71 // pred_fallthru
          _
        // Predicated region
        $region89: #{tpu_custom_call.1} parent=71 // pred_check
          %p543 = pneg %p141
        $region90: #{tpu_custom_call.1} parent=71 // pred_check_branch
          %545 = sbr.rel (%p543) target = $region92
        $region91: #{tpu_custom_call.1} parent=71 // pred_region
          %546 = dma.done [#allocation9], 16
        $region92: #{tpu_custom_call.1} parent=71 // pred_fallthru
          _
        // Predicated region
        $region93: #{tpu_custom_call.1} parent=71 // pred_check
          %p547 = pneg %p162
        $region94: #{tpu_custom_call.1} parent=71 // pred_check_branch
          %549 = sbr.rel (%p547) target = $region96
        $region95: #{tpu_custom_call.1} parent=71 // pred_region
          %550 = dma.done [#allocation12], 16
        $region96: #{tpu_custom_call.1} parent=71 // pred_fallthru
          _
        // Predicated region
        $region97: #{tpu_custom_call.1} parent=71 // pred_check
          %p551 = pneg %p183
        $region98: #{tpu_custom_call.1} parent=71 // pred_check_branch
          %553 = sbr.rel (%p551) target = $region100
        $region99: #{tpu_custom_call.1} parent=71 // pred_region
          %554 = dma.done [#allocation12], 16
        $region100: #{tpu_custom_call.1} parent=71 // pred_fallthru
          _
        // Predicated region
        $region101: #{tpu_custom_call.1} parent=71 // pred_check
          %p555 = pneg %p204
        $region102: #{tpu_custom_call.1} parent=71 // pred_check_branch
          %557 = sbr.rel (%p555) target = $region104
        $region103: #{tpu_custom_call.1} parent=71 // pred_region
          %558 = dma.done [#allocation15], 256
        $region104: #{tpu_custom_call.1} parent=71 // pred_fallthru
          _
        // Predicated region
        $region105: #{tpu_custom_call.1} parent=71 // pred_check
          %p559 = pneg %p225
        $region106: #{tpu_custom_call.1} parent=71 // pred_check_branch
          %561 = sbr.rel (%p559) target = $region108
        $region107: #{tpu_custom_call.1} parent=71 // pred_region
          %562 = dma.done [#allocation15], 16
        $region108: #{tpu_custom_call.1} parent=71 // pred_fallthru
          _
        // Predicated region
        $region109: #{tpu_custom_call.1} parent=71 // pred_check
          %p563 = pneg %p246
        $region110: #{tpu_custom_call.1} parent=71 // pred_check_branch
          %565 = sbr.rel (%p563) target = $region112
        $region111: #{tpu_custom_call.1} parent=71 // pred_region
          %566 = dma.done [#allocation18], 512
        $region112: #{tpu_custom_call.1} parent=71 // pred_fallthru
          _
        // Predicated region
        $region113: #{tpu_custom_call.1} parent=71 // pred_check
          %p567 = pneg %p267
        $region114: #{tpu_custom_call.1} parent=71 // pred_check_branch
          %569 = sbr.rel (%p567) target = $region116
        $region115: #{tpu_custom_call.1} parent=71 // pred_region
          %570 = dma.done [#allocation18], 16
        $region116: #{tpu_custom_call.1} parent=71 // pred_fallthru
          _
        // Predicated region
        $region117: #{tpu_custom_call.1} parent=71 // pred_check
          %p571 = pneg %p288
        $region118: #{tpu_custom_call.1} parent=71 // pred_check_branch
          %573 = sbr.rel (%p571) target = $region120
        $region119: #{tpu_custom_call.1} parent=71 // pred_region
          %574 = dma.done [#allocation21], 16
        $region120: #{tpu_custom_call.1} parent=71 // pred_fallthru
          _
        // Predicated region
        $region121: #{tpu_custom_call.1} parent=71 // pred_check
          %p575 = pneg %p309
        $region122: #{tpu_custom_call.1} parent=71 // pred_check_branch
          %577 = sbr.rel (%p575) target = $region124
        $region123: #{tpu_custom_call.1} parent=71 // pred_region
          %578 = dma.done [#allocation21], 16
        $region124: #{tpu_custom_call.1} parent=71 // pred_fallthru
          _
        %s579 = sand.u32 %s44, 1
        %s580 = scalar_lea.sflag [#allocation3], %s579
        %s581 = sand.u32 %s44, 1
        %s582 = smul.addr %s581, 8
        %s583 = scalar_lea.vmem [#allocation2], %s582
        %p584 = pneg %p57
        %p585 = pneg %p54
        %p586 = pneg %p78
        %p587 = pneg %p75
        %p588 = pneg %p99
        %p589 = pneg %p96
        %p590 = pneg %p120
        %p591 = pneg %p117
        %p592 = pneg %p141
        %p593 = pneg %p138
        %p594 = pneg %p162
        %p595 = pneg %p159
        %p596 = pneg %p183
        %p597 = pneg %p180
        %p598 = pneg %p204
        %p599 = pneg %p201
        %p600 = pneg %p225
        %p601 = pneg %p222
        %p602 = pneg %p246
        %p603 = pneg %p243
        %p604 = pneg %p267
        %p605 = pneg %p264
        %p606 = pneg %p288
        %p607 = pneg %p285
        %p608 = pneg %p309
        %p609 = pneg %p306
        %p610 = pneg %p335
        %p611 = pneg %p332
        %s612 = sand.u32 %s322, 1
        %s613 = scalar_lea.sflag [#allocation4], %s612
        %s614 = sand.u32 %s322, 1
        %s615 = smul.addr %s614, 8
        %s616 = scalar_lea.vmem [#allocation23], %s615
        %v618 = vld [vmem:[%s526] sm:$0xf]
        %v619 = vld [vmem:[%s526 + $0x4] sm:$0x3]
        %v620 = vunpack.c.l.bf16 %v618
        %v621 = vunpack.c.l.bf16 %v619
        %v622 = vld [vmem:[#allocation5] sm:$0xf]
        %v623 = vld [vmem:[#allocation5 + $0x4] sm:$0xf]
        %v624 = vld [vmem:[#allocation5 + $0x8] sm:$0xf]
        %v625 = vld [vmem:[#allocation5 + $0xc] sm:$0xf]
        %v626 = vld [vmem:[#allocation7] sm:$0x1]
        %v628 = vlaneseq
        %v629 = vshrl.u32 %v628, 7
        %v630 = vsub.s32 0, %v629
        %v631 = vrot.slane %v626, %v630
        %v635 = vunpack.c.l.b16 %v618
        %v636 = vunpack.c.l.b16 %v619
        %v637 = vpack.c.b16 %v636, %v635
        %v642 = vunpack.c.l.b16 %v622
        %v643 = vunpack.c.l.b16 %v623
        %v644 = vunpack.c.l.b16 %v624
        %v645 = vunpack.c.l.b16 %v625
        %v646 = vpack.c.b16 %v643, %v642
        %v647 = vpack.c.b16 %v645, %v644
        %vm650 = vcmask 261120
        %v652 = vsel %vm650, %v637, 0
        %654 = vmatprep.subr.bf16.mxu0 0
        %655 = vmatpush1.bf16.msra.mxu0 %v646
        %656 = vmatprep.subr.bf16.mxu0 0
        %657 = vmatpush1.bf16.msra.mxu0 %v647
        %658 = vmatprep.subr.bf16.mxu0 0
        %659 = vmatpush1.bf16.msra.mxu0 0
        %660 = vmatprep.subr.bf16.mxu0 0
        %661 = vmatpush1.bf16.msra.mxu0 0
        %662 = vmatprep.subr.bf16.mxu0 0
        %663 = vmatpush1.bf16.msra.mxu0 0
        %664 = vmatprep.subr.bf16.mxu0 0
        %665 = vmatpush1.bf16.msra.mxu0 0
        %666 = vmatprep.subr.bf16.mxu0 0
        %667 = vmatpush1.bf16.msra.mxu0 0
        %668 = vmatprep.subr.bf16.mxu0 0
        %669 = vmatpush1.bf16.msra.mxu0 0
        %670 = vmatprep.subr.bf16.mxu0 0
        %671 = vmatpush1.bf16.msra.mxu0 0
        %672 = vmatprep.subr.bf16.mxu0 0
        %673 = vmatpush1.bf16.msra.mxu0 0
        %674 = vmatprep.subr.bf16.mxu0 0
        %675 = vmatpush1.bf16.msra.mxu0 0
        %676 = vmatprep.subr.bf16.mxu0 0
        %677 = vmatpush1.bf16.msra.mxu0 0
        %678 = vmatprep.subr.bf16.mxu0 0
        %679 = vmatpush1.bf16.msra.mxu0 0
        %680 = vmatprep.subr.bf16.mxu0 0
        %681 = vmatpush1.bf16.msra.mxu0 0
        %682 = vmatprep.subr.bf16.mxu0 0
        %683 = vmatpush1.bf16.msra.mxu0 0
        %684 = vmatprep.subr.bf16.mxu0 0
        %685 = vmatpush1.bf16.msra.mxu0 0
        %686 = vmatprep.mubr.bf16.mxu0 0
        %687 = vmatmul.mubr.bf16.gmra.mrb[0].mxu0 %v652
        %v688 = vpop.f32.mrb[0].mxu0
        %v689 = vadd.f32 %v631, %v688
        %v690 = vpop.f32.mrb[0].mxu0
        %v691 = vpop.f32.mrb[0].mxu0
        %v692 = vadd.f32 %v631, %v691
        %v693 = vpop.f32.mrb[0].mxu0
        %694 = vdwg.mxu0
        %697 = vrot.lane.b32.xlu0 %v689, 120
        %v698 = vpop.permute.xlu0 %697
        %699 = vrot.lane.b32.xlu0 %v692, 120
        %v700 = vpop.permute.xlu0 %699
        %703 = vrot.lane.b32.xlu0 %v689, 112
        %v704 = vpop.permute.xlu0 %703
        %705 = vrot.lane.b32.xlu0 %v692, 112
        %v706 = vpop.permute.xlu0 %705
        %709 = vrot.lane.b32.xlu0 %v689, 104
        %v710 = vpop.permute.xlu0 %709
        %711 = vrot.lane.b32.xlu0 %v692, 104
        %v712 = vpop.permute.xlu0 %711
        %v715 = vcombine.low %v689, %v704
        %v716 = vcombine.high %v689, %v704
        %v718 = vunpack.c.l.s4 1983009808
        %v719 = vunpack.c.0.s8 %v718
        %v720 = vlaneseq
        %v721 = vshrl.u32 %v720, 7
        %v722 = vsub.s32 %v719, %v721
        %v723 = vrot.slane %v715, %v722
        %v725 = vunpack.c.l.s4 1983009808
        %v726 = vunpack.c.0.s8 %v725
        %v727 = vlaneseq
        %v728 = vshrl.u32 %v727, 7
        %v729 = vsub.s32 %v726, %v728
        %v730 = vrot.slane %v716, %v729
        %v731 = vcombine.low %v698, %v710
        %v732 = vcombine.high %v698, %v710
        %v734 = vunpack.c.l.s4 1983009808
        %v735 = vunpack.c.0.s8 %v734
        %v736 = vlaneseq
        %v737 = vshrl.u32 %v736, 7
        %v738 = vsub.s32 %v735, %v737
        %v739 = vrot.slane %v731, %v738
        %v741 = vunpack.c.l.s4 1983009808
        %v742 = vunpack.c.0.s8 %v741
        %v743 = vlaneseq
        %v744 = vshrl.u32 %v743, 7
        %v745 = vsub.s32 %v742, %v744
        %v746 = vrot.slane %v732, %v745
        %v747 = vcombine.low %v723, %v739
        %v748 = vcombine.high %v723, %v739
        %v750 = vunpack.c.l.s4 1934713408
        %v751 = vunpack.c.0.s8 %v750
        %v752 = vlaneseq
        %v753 = vshrl.u32 %v752, 7
        %v754 = vsub.s32 %v751, %v753
        %v755 = vrot.slane %v747, %v754
        %v757 = vunpack.c.l.s4 1934713408
        %v758 = vunpack.c.0.s8 %v757
        %v759 = vlaneseq
        %v760 = vshrl.u32 %v759, 7
        %v761 = vsub.s32 %v758, %v760
        %v762 = vrot.slane %v748, %v761
        %v763 = vcombine.low %v730, %v746
        %v764 = vcombine.high %v730, %v746
        %v766 = vunpack.c.l.s4 1934713408
        %v767 = vunpack.c.0.s8 %v766
        %v768 = vlaneseq
        %v769 = vshrl.u32 %v768, 7
        %v770 = vsub.s32 %v767, %v769
        %v771 = vrot.slane %v763, %v770
        %v773 = vunpack.c.l.s4 1934713408
        %v774 = vunpack.c.0.s8 %v773
        %v775 = vlaneseq
        %v776 = vshrl.u32 %v775, 7
        %v777 = vsub.s32 %v774, %v776
        %v778 = vrot.slane %v764, %v777
        %v779 = vcombine.high %v755, 0.0
        %v780 = vcombine.high %v762, 0.0
        %v781 = vcombine.high %v771, 0.0
        %v782 = vcombine.high %v778, 0.0
        %v783 = vcombine.low %v692, %v706
        %v785 = vunpack.c.l.s4 1983009808
        %v786 = vunpack.c.0.s8 %v785
        %v787 = vlaneseq
        %v788 = vshrl.u32 %v787, 7
        %v789 = vsub.s32 %v786, %v788
        %v790 = vrot.slane %v783, %v789
        %v791 = vcombine.low %v700, %v712
        %v793 = vunpack.c.l.s4 1983009808
        %v794 = vunpack.c.0.s8 %v793
        %v795 = vlaneseq
        %v796 = vshrl.u32 %v795, 7
        %v797 = vsub.s32 %v794, %v796
        %v798 = vrot.slane %v791, %v797
        %v799 = vcombine.low %v790, %v798
        %v800 = vcombine.high %v790, %v798
        %v802 = vunpack.c.l.s4 1934713408
        %v803 = vunpack.c.0.s8 %v802
        %v804 = vlaneseq
        %v805 = vshrl.u32 %v804, 7
        %v806 = vsub.s32 %v803, %v805
        %v807 = vrot.slane %v799, %v806
        %v809 = vunpack.c.l.s4 1934713408
        %v810 = vunpack.c.0.s8 %v809
        %v811 = vlaneseq
        %v812 = vshrl.u32 %v811, 7
        %v813 = vsub.s32 %v810, %v812
        %v814 = vrot.slane %v800, %v813
        %v815 = vcombine.high %v807, 0.0
        %v816 = vcombine.high %v814, 0.0
        %v817 = vcombine.low %v755, %v762
        %v819 = vunpack.c.l.s4 1983009808
        %v820 = vunpack.c.0.s8 %v819
        %v821 = vlaneseq
        %v822 = vshrl.u32 %v821, 7
        %v823 = vsub.s32 %v820, %v822
        %v824 = vrot.slane %v817, %v823
        %v825 = vcombine.low %v779, %v780
        %v827 = vunpack.c.l.s4 1983009808
        %v828 = vunpack.c.0.s8 %v827
        %v829 = vlaneseq
        %v830 = vshrl.u32 %v829, 7
        %v831 = vsub.s32 %v828, %v830
        %v832 = vrot.slane %v825, %v831
        %v833 = vcombine.low %v771, %v778
        %v835 = vunpack.c.l.s4 1983009808
        %v836 = vunpack.c.0.s8 %v835
        %v837 = vlaneseq
        %v838 = vshrl.u32 %v837, 7
        %v839 = vsub.s32 %v836, %v838
        %v840 = vrot.slane %v833, %v839
        %v841 = vcombine.low %v781, %v782
        %v843 = vunpack.c.l.s4 1983009808
        %v844 = vunpack.c.0.s8 %v843
        %v845 = vlaneseq
        %v846 = vshrl.u32 %v845, 7
        %v847 = vsub.s32 %v844, %v846
        %v848 = vrot.slane %v841, %v847
        %v849 = vcombine.low %v824, %v832
        %v850 = vcombine.high %v824, %v832
        %v852 = vunpack.c.l.s4 1934713408
        %v853 = vunpack.c.0.s8 %v852
        %v854 = vlaneseq
        %v855 = vshrl.u32 %v854, 7
        %v856 = vsub.s32 %v853, %v855
        %v857 = vrot.slane %v849, %v856
        %v859 = vunpack.c.l.s4 1934713408
        %v860 = vunpack.c.0.s8 %v859
        %v861 = vlaneseq
        %v862 = vshrl.u32 %v861, 7
        %v863 = vsub.s32 %v860, %v862
        %v864 = vrot.slane %v850, %v863
        %v865 = vcombine.low %v840, %v848
        %v866 = vcombine.high %v840, %v848
        %v868 = vunpack.c.l.s4 1934713408
        %v869 = vunpack.c.0.s8 %v868
        %v870 = vlaneseq
        %v871 = vshrl.u32 %v870, 7
        %v872 = vsub.s32 %v869, %v871
        %v873 = vrot.slane %v865, %v872
        %v875 = vunpack.c.l.s4 1934713408
        %v876 = vunpack.c.0.s8 %v875
        %v877 = vlaneseq
        %v878 = vshrl.u32 %v877, 7
        %v879 = vsub.s32 %v876, %v878
        %v880 = vrot.slane %v866, %v879
        %v881 = vcombine.low %v857, %v873
        %v882 = vcombine.high %v857, %v873
        %v883 = vcombine.low %v864, %v880
        %v884 = vcombine.high %v864, %v880
        %v885 = vcombine.low %v807, %v814
        %v887 = vunpack.c.l.s4 1983009808
        %v888 = vunpack.c.0.s8 %v887
        %v889 = vlaneseq
        %v890 = vshrl.u32 %v889, 7
        %v891 = vsub.s32 %v888, %v890
        %v892 = vrot.slane %v885, %v891
        %v893 = vcombine.low %v815, %v816
        %v895 = vunpack.c.l.s4 1983009808
        %v896 = vunpack.c.0.s8 %v895
        %v897 = vlaneseq
        %v898 = vshrl.u32 %v897, 7
        %v899 = vsub.s32 %v896, %v898
        %v900 = vrot.slane %v893, %v899
        %v901 = vcombine.low %v892, %v900
        %v902 = vcombine.high %v892, %v900
        %v904 = vunpack.c.l.s4 1934713408
        %v905 = vunpack.c.0.s8 %v904
        %v906 = vlaneseq
        %v907 = vshrl.u32 %v906, 7
        %v908 = vsub.s32 %v905, %v907
        %v909 = vrot.slane %v901, %v908
        %v911 = vunpack.c.l.s4 1934713408
        %v912 = vunpack.c.0.s8 %v911
        %v913 = vlaneseq
        %v914 = vshrl.u32 %v913, 7
        %v915 = vsub.s32 %v912, %v914
        %v916 = vrot.slane %v902, %v915
        %v917 = vcombine.high %v909, 0.0
        %v918 = vcombine.high %v916, 0.0
        %v919 = vpack.c.bf16 %v909, %v881
        %v920 = vpack.c.bf16 %v917, %v882
        %v921 = vpack.c.bf16 %v916, %v883
        %v922 = vpack.c.bf16 %v918, %v884
        %923 = vrot.lane.b32.xlu0 %v689, 96
        %v924 = vpop.permute.xlu0 %923
        %925 = vrot.lane.b32.xlu0 %v692, 96
        %v926 = vpop.permute.xlu0 %925
        %927 = vrot.lane.b32.xlu0 %v698, 96
        %v928 = vpop.permute.xlu0 %927
        %929 = vrot.lane.b32.xlu0 %v700, 96
        %v930 = vpop.permute.xlu0 %929
        %931 = vrot.lane.b32.xlu0 %v704, 96
        %v932 = vpop.permute.xlu0 %931
        %933 = vrot.lane.b32.xlu0 %v706, 96
        %v934 = vpop.permute.xlu0 %933
        %935 = vrot.lane.b32.xlu0 %v710, 96
        %v936 = vpop.permute.xlu0 %935
        %937 = vrot.lane.b32.xlu0 %v712, 96
        %v938 = vpop.permute.xlu0 %937
        %v947 = vcombine.low %v924, %v932
        %v948 = vcombine.high %v924, %v932
        %v950 = vunpack.c.l.s4 1983009808
        %v951 = vunpack.c.0.s8 %v950
        %v952 = vlaneseq
        %v953 = vshrl.u32 %v952, 7
        %v954 = vsub.s32 %v951, %v953
        %v955 = vrot.slane %v947, %v954
        %v957 = vunpack.c.l.s4 1983009808
        %v958 = vunpack.c.0.s8 %v957
        %v959 = vlaneseq
        %v960 = vshrl.u32 %v959, 7
        %v961 = vsub.s32 %v958, %v960
        %v962 = vrot.slane %v948, %v961
        %v963 = vcombine.low %v928, %v936
        %v964 = vcombine.high %v928, %v936
        %v966 = vunpack.c.l.s4 1983009808
        %v967 = vunpack.c.0.s8 %v966
        %v968 = vlaneseq
        %v969 = vshrl.u32 %v968, 7
        %v970 = vsub.s32 %v967, %v969
        %v971 = vrot.slane %v963, %v970
        %v973 = vunpack.c.l.s4 1983009808
        %v974 = vunpack.c.0.s8 %v973
        %v975 = vlaneseq
        %v976 = vshrl.u32 %v975, 7
        %v977 = vsub.s32 %v974, %v976
        %v978 = vrot.slane %v964, %v977
        %v979 = vcombine.low %v955, %v971
        %v980 = vcombine.high %v955, %v971
        %v982 = vunpack.c.l.s4 1934713408
        %v983 = vunpack.c.0.s8 %v982
        %v984 = vlaneseq
        %v985 = vshrl.u32 %v984, 7
        %v986 = vsub.s32 %v983, %v985
        %v987 = vrot.slane %v979, %v986
        %v989 = vunpack.c.l.s4 1934713408
        %v990 = vunpack.c.0.s8 %v989
        %v991 = vlaneseq
        %v992 = vshrl.u32 %v991, 7
        %v993 = vsub.s32 %v990, %v992
        %v994 = vrot.slane %v980, %v993
        %v995 = vcombine.low %v962, %v978
        %v996 = vcombine.high %v962, %v978
        %v998 = vunpack.c.l.s4 1934713408
        %v999 = vunpack.c.0.s8 %v998
        %v1000 = vlaneseq
        %v1001 = vshrl.u32 %v1000, 7
        %v1002 = vsub.s32 %v999, %v1001
        %v1003 = vrot.slane %v995, %v1002
        %v1005 = vunpack.c.l.s4 1934713408
        %v1006 = vunpack.c.0.s8 %v1005
        %v1007 = vlaneseq
        %v1008 = vshrl.u32 %v1007, 7
        %v1009 = vsub.s32 %v1006, %v1008
        %v1010 = vrot.slane %v996, %v1009
        %v1011 = vcombine.high %v987, 0.0
        %v1012 = vcombine.high %v994, 0.0
        %v1013 = vcombine.high %v1003, 0.0
        %v1014 = vcombine.high %v1010, 0.0
        %v1015 = vcombine.low %v926, %v934
        %v1017 = vunpack.c.l.s4 1983009808
        %v1018 = vunpack.c.0.s8 %v1017
        %v1019 = vlaneseq
        %v1020 = vshrl.u32 %v1019, 7
        %v1021 = vsub.s32 %v1018, %v1020
        %v1022 = vrot.slane %v1015, %v1021
        %v1023 = vcombine.low %v930, %v938
        %v1025 = vunpack.c.l.s4 1983009808
        %v1026 = vunpack.c.0.s8 %v1025
        %v1027 = vlaneseq
        %v1028 = vshrl.u32 %v1027, 7
        %v1029 = vsub.s32 %v1026, %v1028
        %v1030 = vrot.slane %v1023, %v1029
        %v1031 = vcombine.low %v1022, %v1030
        %v1032 = vcombine.high %v1022, %v1030
        %v1034 = vunpack.c.l.s4 1934713408
        %v1035 = vunpack.c.0.s8 %v1034
        %v1036 = vlaneseq
        %v1037 = vshrl.u32 %v1036, 7
        %v1038 = vsub.s32 %v1035, %v1037
        %v1039 = vrot.slane %v1031, %v1038
        %v1041 = vunpack.c.l.s4 1934713408
        %v1042 = vunpack.c.0.s8 %v1041
        %v1043 = vlaneseq
        %v1044 = vshrl.u32 %v1043, 7
        %v1045 = vsub.s32 %v1042, %v1044
        %v1046 = vrot.slane %v1032, %v1045
        %v1047 = vcombine.high %v1039, 0.0
        %v1048 = vcombine.high %v1046, 0.0
        %v1049 = vcombine.low %v987, %v994
        %v1051 = vunpack.c.l.s4 1983009808
        %v1052 = vunpack.c.0.s8 %v1051
        %v1053 = vlaneseq
        %v1054 = vshrl.u32 %v1053, 7
        %v1055 = vsub.s32 %v1052, %v1054
        %v1056 = vrot.slane %v1049, %v1055
        %v1057 = vcombine.low %v1011, %v1012
        %v1059 = vunpack.c.l.s4 1983009808
        %v1060 = vunpack.c.0.s8 %v1059
        %v1061 = vlaneseq
        %v1062 = vshrl.u32 %v1061, 7
        %v1063 = vsub.s32 %v1060, %v1062
        %v1064 = vrot.slane %v1057, %v1063
        %v1065 = vcombine.low %v1003, %v1010
        %v1067 = vunpack.c.l.s4 1983009808
        %v1068 = vunpack.c.0.s8 %v1067
        %v1069 = vlaneseq
        %v1070 = vshrl.u32 %v1069, 7
        %v1071 = vsub.s32 %v1068, %v1070
        %v1072 = vrot.slane %v1065, %v1071
        %v1073 = vcombine.low %v1013, %v1014
        %v1075 = vunpack.c.l.s4 1983009808
        %v1076 = vunpack.c.0.s8 %v1075
        %v1077 = vlaneseq
        %v1078 = vshrl.u32 %v1077, 7
        %v1079 = vsub.s32 %v1076, %v1078
        %v1080 = vrot.slane %v1073, %v1079
        %v1081 = vcombine.low %v1056, %v1064
        %v1082 = vcombine.high %v1056, %v1064
        %v1084 = vunpack.c.l.s4 1934713408
        %v1085 = vunpack.c.0.s8 %v1084
        %v1086 = vlaneseq
        %v1087 = vshrl.u32 %v1086, 7
        %v1088 = vsub.s32 %v1085, %v1087
        %v1089 = vrot.slane %v1081, %v1088
        %v1091 = vunpack.c.l.s4 1934713408
        %v1092 = vunpack.c.0.s8 %v1091
        %v1093 = vlaneseq
        %v1094 = vshrl.u32 %v1093, 7
        %v1095 = vsub.s32 %v1092, %v1094
        %v1096 = vrot.slane %v1082, %v1095
        %v1097 = vcombine.low %v1072, %v1080
        %v1098 = vcombine.high %v1072, %v1080
        %v1100 = vunpack.c.l.s4 1934713408
        %v1101 = vunpack.c.0.s8 %v1100
        %v1102 = vlaneseq
        %v1103 = vshrl.u32 %v1102, 7
        %v1104 = vsub.s32 %v1101, %v1103
        %v1105 = vrot.slane %v1097, %v1104
        %v1107 = vunpack.c.l.s4 1934713408
        %v1108 = vunpack.c.0.s8 %v1107
        %v1109 = vlaneseq
        %v1110 = vshrl.u32 %v1109, 7
        %v1111 = vsub.s32 %v1108, %v1110
        %v1112 = vrot.slane %v1098, %v1111
        %v1113 = vcombine.low %v1089, %v1105
        %v1114 = vcombine.high %v1089, %v1105
        %v1115 = vcombine.low %v1096, %v1112
        %v1116 = vcombine.high %v1096, %v1112
        %v1117 = vcombine.low %v1039, %v1046
        %v1119 = vunpack.c.l.s4 1983009808
        %v1120 = vunpack.c.0.s8 %v1119
        %v1121 = vlaneseq
        %v1122 = vshrl.u32 %v1121, 7
        %v1123 = vsub.s32 %v1120, %v1122
        %v1124 = vrot.slane %v1117, %v1123
        %v1125 = vcombine.low %v1047, %v1048
        %v1127 = vunpack.c.l.s4 1983009808
        %v1128 = vunpack.c.0.s8 %v1127
        %v1129 = vlaneseq
        %v1130 = vshrl.u32 %v1129, 7
        %v1131 = vsub.s32 %v1128, %v1130
        %v1132 = vrot.slane %v1125, %v1131
        %v1133 = vcombine.low %v1124, %v1132
        %v1134 = vcombine.high %v1124, %v1132
        %v1136 = vunpack.c.l.s4 1934713408
        %v1137 = vunpack.c.0.s8 %v1136
        %v1138 = vlaneseq
        %v1139 = vshrl.u32 %v1138, 7
        %v1140 = vsub.s32 %v1137, %v1139
        %v1141 = vrot.slane %v1133, %v1140
        %v1143 = vunpack.c.l.s4 1934713408
        %v1144 = vunpack.c.0.s8 %v1143
        %v1145 = vlaneseq
        %v1146 = vshrl.u32 %v1145, 7
        %v1147 = vsub.s32 %v1144, %v1146
        %v1148 = vrot.slane %v1134, %v1147
        %v1149 = vcombine.high %v1141, 0.0
        %v1150 = vcombine.high %v1148, 0.0
        %v1151 = vpack.c.bf16 %v1141, %v1113
        %v1152 = vpack.c.bf16 %v1149, %v1114
        %v1153 = vpack.c.bf16 %v1148, %v1115
        %v1154 = vpack.c.bf16 %v1150, %v1116
        %1155 = vrot.lane.b32.xlu0 %v689, 64
        %v1156 = vpop.permute.xlu0 %1155
        %1157 = vrot.lane.b32.xlu0 %v692, 64
        %v1158 = vpop.permute.xlu0 %1157
        %1159 = vrot.lane.b32.xlu0 %v698, 64
        %v1160 = vpop.permute.xlu0 %1159
        %1161 = vrot.lane.b32.xlu0 %v700, 64
        %v1162 = vpop.permute.xlu0 %1161
        %1163 = vrot.lane.b32.xlu0 %v704, 64
        %v1164 = vpop.permute.xlu0 %1163
        %1165 = vrot.lane.b32.xlu0 %v706, 64
        %v1166 = vpop.permute.xlu0 %1165
        %1167 = vrot.lane.b32.xlu0 %v710, 64
        %v1168 = vpop.permute.xlu0 %1167
        %1169 = vrot.lane.b32.xlu0 %v712, 64
        %v1170 = vpop.permute.xlu0 %1169
        %v1179 = vcombine.low %v1156, %v1164
        %v1180 = vcombine.high %v1156, %v1164
        %v1182 = vunpack.c.l.s4 1983009808
        %v1183 = vunpack.c.0.s8 %v1182
        %v1184 = vlaneseq
        %v1185 = vshrl.u32 %v1184, 7
        %v1186 = vsub.s32 %v1183, %v1185
        %v1187 = vrot.slane %v1179, %v1186
        %v1189 = vunpack.c.l.s4 1983009808
        %v1190 = vunpack.c.0.s8 %v1189
        %v1191 = vlaneseq
        %v1192 = vshrl.u32 %v1191, 7
        %v1193 = vsub.s32 %v1190, %v1192
        %v1194 = vrot.slane %v1180, %v1193
        %v1195 = vcombine.low %v1160, %v1168
        %v1196 = vcombine.high %v1160, %v1168
        %v1198 = vunpack.c.l.s4 1983009808
        %v1199 = vunpack.c.0.s8 %v1198
        %v1200 = vlaneseq
        %v1201 = vshrl.u32 %v1200, 7
        %v1202 = vsub.s32 %v1199, %v1201
        %v1203 = vrot.slane %v1195, %v1202
        %v1205 = vunpack.c.l.s4 1983009808
        %v1206 = vunpack.c.0.s8 %v1205
        %v1207 = vlaneseq
        %v1208 = vshrl.u32 %v1207, 7
        %v1209 = vsub.s32 %v1206, %v1208
        %v1210 = vrot.slane %v1196, %v1209
        %v1211 = vcombine.low %v1187, %v1203
        %v1212 = vcombine.high %v1187, %v1203
        %v1214 = vunpack.c.l.s4 1934713408
        %v1215 = vunpack.c.0.s8 %v1214
        %v1216 = vlaneseq
        %v1217 = vshrl.u32 %v1216, 7
        %v1218 = vsub.s32 %v1215, %v1217
        %v1219 = vrot.slane %v1211, %v1218
        %v1221 = vunpack.c.l.s4 1934713408
        %v1222 = vunpack.c.0.s8 %v1221
        %v1223 = vlaneseq
        %v1224 = vshrl.u32 %v1223, 7
        %v1225 = vsub.s32 %v1222, %v1224
        %v1226 = vrot.slane %v1212, %v1225
        %v1227 = vcombine.low %v1194, %v1210
        %v1228 = vcombine.high %v1194, %v1210
        %v1230 = vunpack.c.l.s4 1934713408
        %v1231 = vunpack.c.0.s8 %v1230
        %v1232 = vlaneseq
        %v1233 = vshrl.u32 %v1232, 7
        %v1234 = vsub.s32 %v1231, %v1233
        %v1235 = vrot.slane %v1227, %v1234
        %v1237 = vunpack.c.l.s4 1934713408
        %v1238 = vunpack.c.0.s8 %v1237
        %v1239 = vlaneseq
        %v1240 = vshrl.u32 %v1239, 7
        %v1241 = vsub.s32 %v1238, %v1240
        %v1242 = vrot.slane %v1228, %v1241
        %v1243 = vcombine.high %v1219, 0.0
        %v1244 = vcombine.high %v1226, 0.0
        %v1245 = vcombine.high %v1235, 0.0
        %v1246 = vcombine.high %v1242, 0.0
        %v1247 = vcombine.low %v1158, %v1166
        %v1249 = vunpack.c.l.s4 1983009808
        %v1250 = vunpack.c.0.s8 %v1249
        %v1251 = vlaneseq
        %v1252 = vshrl.u32 %v1251, 7
        %v1253 = vsub.s32 %v1250, %v1252
        %v1254 = vrot.slane %v1247, %v1253
        %v1255 = vcombine.low %v1162, %v1170
        %v1257 = vunpack.c.l.s4 1983009808
        %v1258 = vunpack.c.0.s8 %v1257
        %v1259 = vlaneseq
        %v1260 = vshrl.u32 %v1259, 7
        %v1261 = vsub.s32 %v1258, %v1260
        %v1262 = vrot.slane %v1255, %v1261
        %v1263 = vcombine.low %v1254, %v1262
        %v1264 = vcombine.high %v1254, %v1262
        %v1266 = vunpack.c.l.s4 1934713408
        %v1267 = vunpack.c.0.s8 %v1266
        %v1268 = vlaneseq
        %v1269 = vshrl.u32 %v1268, 7
        %v1270 = vsub.s32 %v1267, %v1269
        %v1271 = vrot.slane %v1263, %v1270
        %v1273 = vunpack.c.l.s4 1934713408
        %v1274 = vunpack.c.0.s8 %v1273
        %v1275 = vlaneseq
        %v1276 = vshrl.u32 %v1275, 7
        %v1277 = vsub.s32 %v1274, %v1276
        %v1278 = vrot.slane %v1264, %v1277
        %v1279 = vcombine.high %v1271, 0.0
        %v1280 = vcombine.high %v1278, 0.0
        %v1281 = vcombine.low %v1219, %v1226
        %v1283 = vunpack.c.l.s4 1983009808
        %v1284 = vunpack.c.0.s8 %v1283
        %v1285 = vlaneseq
        %v1286 = vshrl.u32 %v1285, 7
        %v1287 = vsub.s32 %v1284, %v1286
        %v1288 = vrot.slane %v1281, %v1287
        %v1289 = vcombine.low %v1243, %v1244
        %v1291 = vunpack.c.l.s4 1983009808
        %v1292 = vunpack.c.0.s8 %v1291
        %v1293 = vlaneseq
        %v1294 = vshrl.u32 %v1293, 7
        %v1295 = vsub.s32 %v1292, %v1294
        %v1296 = vrot.slane %v1289, %v1295
        %v1297 = vcombine.low %v1235, %v1242
        %v1299 = vunpack.c.l.s4 1983009808
        %v1300 = vunpack.c.0.s8 %v1299
        %v1301 = vlaneseq
        %v1302 = vshrl.u32 %v1301, 7
        %v1303 = vsub.s32 %v1300, %v1302
        %v1304 = vrot.slane %v1297, %v1303
        %v1305 = vcombine.low %v1245, %v1246
        %v1307 = vunpack.c.l.s4 1983009808
        %v1308 = vunpack.c.0.s8 %v1307
        %v1309 = vlaneseq
        %v1310 = vshrl.u32 %v1309, 7
        %v1311 = vsub.s32 %v1308, %v1310
        %v1312 = vrot.slane %v1305, %v1311
        %v1313 = vcombine.low %v1288, %v1296
        %v1314 = vcombine.high %v1288, %v1296
        %v1316 = vunpack.c.l.s4 1934713408
        %v1317 = vunpack.c.0.s8 %v1316
        %v1318 = vlaneseq
        %v1319 = vshrl.u32 %v1318, 7
        %v1320 = vsub.s32 %v1317, %v1319
        %v1321 = vrot.slane %v1313, %v1320
        %v1323 = vunpack.c.l.s4 1934713408
        %v1324 = vunpack.c.0.s8 %v1323
        %v1325 = vlaneseq
        %v1326 = vshrl.u32 %v1325, 7
        %v1327 = vsub.s32 %v1324, %v1326
        %v1328 = vrot.slane %v1314, %v1327
        %v1329 = vcombine.low %v1304, %v1312
        %v1330 = vcombine.high %v1304, %v1312
        %v1332 = vunpack.c.l.s4 1934713408
        %v1333 = vunpack.c.0.s8 %v1332
        %v1334 = vlaneseq
        %v1335 = vshrl.u32 %v1334, 7
        %v1336 = vsub.s32 %v1333, %v1335
        %v1337 = vrot.slane %v1329, %v1336
        %v1339 = vunpack.c.l.s4 1934713408
        %v1340 = vunpack.c.0.s8 %v1339
        %v1341 = vlaneseq
        %v1342 = vshrl.u32 %v1341, 7
        %v1343 = vsub.s32 %v1340, %v1342
        %v1344 = vrot.slane %v1330, %v1343
        %v1345 = vcombine.low %v1321, %v1337
        %v1346 = vcombine.high %v1321, %v1337
        %v1347 = vcombine.low %v1328, %v1344
        %v1348 = vcombine.high %v1328, %v1344
        %v1349 = vcombine.low %v1271, %v1278
        %v1351 = vunpack.c.l.s4 1983009808
        %v1352 = vunpack.c.0.s8 %v1351
        %v1353 = vlaneseq
        %v1354 = vshrl.u32 %v1353, 7
        %v1355 = vsub.s32 %v1352, %v1354
        %v1356 = vrot.slane %v1349, %v1355
        %v1357 = vcombine.low %v1279, %v1280
        %v1359 = vunpack.c.l.s4 1983009808
        %v1360 = vunpack.c.0.s8 %v1359
        %v1361 = vlaneseq
        %v1362 = vshrl.u32 %v1361, 7
        %v1363 = vsub.s32 %v1360, %v1362
        %v1364 = vrot.slane %v1357, %v1363
        %v1365 = vcombine.low %v1356, %v1364
        %v1366 = vcombine.high %v1356, %v1364
        %v1368 = vunpack.c.l.s4 1934713408
        %v1369 = vunpack.c.0.s8 %v1368
        %v1370 = vlaneseq
        %v1371 = vshrl.u32 %v1370, 7
        %v1372 = vsub.s32 %v1369, %v1371
        %v1373 = vrot.slane %v1365, %v1372
        %v1375 = vunpack.c.l.s4 1934713408
        %v1376 = vunpack.c.0.s8 %v1375
        %v1377 = vlaneseq
        %v1378 = vshrl.u32 %v1377, 7
        %v1379 = vsub.s32 %v1376, %v1378
        %v1380 = vrot.slane %v1366, %v1379
        %v1381 = vcombine.high %v1373, 0.0
        %v1382 = vcombine.high %v1380, 0.0
        %v1383 = vpack.c.bf16 %v1373, %v1345
        %v1384 = vpack.c.bf16 %v1381, %v1346
        %v1385 = vpack.c.bf16 %v1380, %v1347
        %v1386 = vpack.c.bf16 %v1382, %v1348
        %vm1387 = vcmask 64512
        %v1389 = vsel %vm1387, %v919, 0
        %v1392 = vsel %vm1387, %v1151, 0
        %1394 = vmatprep.subr.bf16.mxu0 0
        %1395 = vmatpush1.bf16.xpose.msra.mxu0 %v1392
        %1396 = vmatprep.subr.bf16.mxu0 0
        %1397 = vmatpush1.bf16.xpose.msra.mxu0 0
        %1398 = vmatprep.subr.bf16.mxu0 0
        %1399 = vmatpush1.bf16.xpose.msra.mxu0 0
        %1400 = vmatprep.subr.bf16.mxu0 0
        %1401 = vmatpush1.bf16.xpose.msra.mxu0 0
        %1402 = vmatprep.subr.bf16.mxu0 0
        %1403 = vmatpush1.bf16.xpose.msra.mxu0 0
        %1404 = vmatprep.subr.bf16.mxu0 0
        %1405 = vmatpush1.bf16.xpose.msra.mxu0 0
        %1406 = vmatprep.subr.bf16.mxu0 0
        %1407 = vmatpush1.bf16.xpose.msra.mxu0 0
        %1408 = vmatprep.subr.bf16.mxu0 0
        %1409 = vmatpush1.bf16.xpose.msra.mxu0 0
        %1410 = vmatprep.subr.bf16.mxu0 0
        %1411 = vmatpush1.bf16.xpose.msra.mxu0 0
        %1412 = vmatprep.subr.bf16.mxu0 0
        %1413 = vmatpush1.bf16.xpose.msra.mxu0 0
        %1414 = vmatprep.subr.bf16.mxu0 0
        %1415 = vmatpush1.bf16.xpose.msra.mxu0 0
        %1416 = vmatprep.subr.bf16.mxu0 0
        %1417 = vmatpush1.bf16.xpose.msra.mxu0 0
        %1418 = vmatprep.subr.bf16.mxu0 0
        %1419 = vmatpush1.bf16.xpose.msra.mxu0 0
        %1420 = vmatprep.subr.bf16.mxu0 0
        %1421 = vmatpush1.bf16.xpose.msra.mxu0 0
        %1422 = vmatprep.subr.bf16.mxu0 0
        %1423 = vmatpush1.bf16.xpose.msra.mxu0 0
        %1424 = vmatprep.subr.bf16.mxu0 0
        %1425 = vmatpush1.bf16.xpose.msra.mxu0 0
        %1426 = vmatprep.mubr.bf16.mxu0 0
        %1427 = vmatmul.mubr.bf16.gmra.mrb[0].mxu0 %v1389
        %v1428 = vpop.f32.mrb[0].mxu0
        %v1429 = vadd.f32 0.0, %v1428
        %v1430 = vpop.f32.mrb[0].mxu0
        %v1431 = vpop.f32.mrb[0].mxu0
        %v1432 = vadd.f32 0.0, %v1431
        %v1433 = vpop.f32.mrb[0].mxu0
        %1434 = vdwg.mxu0
        %v1436 = vsel %vm1387, %v920, 0
        %v1439 = vsel %vm1387, %v1152, 0
        %1441 = vmatprep.subr.bf16.mxu0 0
        %1442 = vmatpush1.bf16.xpose.msra.mxu0 %v1439
        %1443 = vmatprep.subr.bf16.mxu0 0
        %1444 = vmatpush1.bf16.xpose.msra.mxu0 0
        %1445 = vmatprep.subr.bf16.mxu0 0
        %1446 = vmatpush1.bf16.xpose.msra.mxu0 0
        %1447 = vmatprep.subr.bf16.mxu0 0
        %1448 = vmatpush1.bf16.xpose.msra.mxu0 0
        %1449 = vmatprep.subr.bf16.mxu0 0
        %1450 = vmatpush1.bf16.xpose.msra.mxu0 0
        %1451 = vmatprep.subr.bf16.mxu0 0
        %1452 = vmatpush1.bf16.xpose.msra.mxu0 0
        %1453 = vmatprep.subr.bf16.mxu0 0
        %1454 = vmatpush1.bf16.xpose.msra.mxu0 0
        %1455 = vmatprep.subr.bf16.mxu0 0
        %1456 = vmatpush1.bf16.xpose.msra.mxu0 0
        %1457 = vmatprep.subr.bf16.mxu0 0
        %1458 = vmatpush1.bf16.xpose.msra.mxu0 0
        %1459 = vmatprep.subr.bf16.mxu0 0
        %1460 = vmatpush1.bf16.xpose.msra.mxu0 0
        %1461 = vmatprep.subr.bf16.mxu0 0
        %1462 = vmatpush1.bf16.xpose.msra.mxu0 0
        %1463 = vmatprep.subr.bf16.mxu0 0
        %1464 = vmatpush1.bf16.xpose.msra.mxu0 0
        %1465 = vmatprep.subr.bf16.mxu0 0
        %1466 = vmatpush1.bf16.xpose.msra.mxu0 0
        %1467 = vmatprep.subr.bf16.mxu0 0
        %1468 = vmatpush1.bf16.xpose.msra.mxu0 0
        %1469 = vmatprep.subr.bf16.mxu0 0
        %1470 = vmatpush1.bf16.xpose.msra.mxu0 0
        %1471 = vmatprep.subr.bf16.mxu0 0
        %1472 = vmatpush1.bf16.xpose.msra.mxu0 0
        %1473 = vmatprep.mubr.bf16.mxu0 0
        %1474 = vmatmul.mubr.bf16.gmra.mrb[0].mxu0 %v1436
        %v1475 = vpop.f32.mrb[0].mxu0
        %v1476 = vadd.f32 0.0, %v1475
        %v1477 = vpop.f32.mrb[0].mxu0
        %v1478 = vpop.f32.mrb[0].mxu0
        %v1479 = vadd.f32 0.0, %v1478
        %v1480 = vpop.f32.mrb[0].mxu0
        %1481 = vdwg.mxu0
        %v1483 = vsel %vm1387, %v921, 0
        %v1486 = vsel %vm1387, %v1153, 0
        %1488 = vmatprep.subr.bf16.mxu0 0
        %1489 = vmatpush1.bf16.xpose.msra.mxu0 %v1486
        %1490 = vmatprep.subr.bf16.mxu0 0
        %1491 = vmatpush1.bf16.xpose.msra.mxu0 0
        %1492 = vmatprep.subr.bf16.mxu0 0
        %1493 = vmatpush1.bf16.xpose.msra.mxu0 0
        %1494 = vmatprep.subr.bf16.mxu0 0
        %1495 = vmatpush1.bf16.xpose.msra.mxu0 0
        %1496 = vmatprep.subr.bf16.mxu0 0
        %1497 = vmatpush1.bf16.xpose.msra.mxu0 0
        %1498 = vmatprep.subr.bf16.mxu0 0
        %1499 = vmatpush1.bf16.xpose.msra.mxu0 0
        %1500 = vmatprep.subr.bf16.mxu0 0
        %1501 = vmatpush1.bf16.xpose.msra.mxu0 0
        %1502 = vmatprep.subr.bf16.mxu0 0
        %1503 = vmatpush1.bf16.xpose.msra.mxu0 0
        %1504 = vmatprep.subr.bf16.mxu0 0
        %1505 = vmatpush1.bf16.xpose.msra.mxu0 0
        %1506 = vmatprep.subr.bf16.mxu0 0
        %1507 = vmatpush1.bf16.xpose.msra.mxu0 0
        %1508 = vmatprep.subr.bf16.mxu0 0
        %1509 = vmatpush1.bf16.xpose.msra.mxu0 0
        %1510 = vmatprep.subr.bf16.mxu0 0
        %1511 = vmatpush1.bf16.xpose.msra.mxu0 0
        %1512 = vmatprep.subr.bf16.mxu0 0
        %1513 = vmatpush1.bf16.xpose.msra.mxu0 0
        %1514 = vmatprep.subr.bf16.mxu0 0
        %1515 = vmatpush1.bf16.xpose.msra.mxu0 0
        %1516 = vmatprep.subr.bf16.mxu0 0
        %1517 = vmatpush1.bf16.xpose.msra.mxu0 0
        %1518 = vmatprep.subr.bf16.mxu0 0
        %1519 = vmatpush1.bf16.xpose.msra.mxu0 0
        %1520 = vmatprep.mubr.bf16.mxu0 0
        %1521 = vmatmul.mubr.bf16.gmra.mrb[0].mxu0 %v1483
        %v1522 = vpop.f32.mrb[0].mxu0
        %v1523 = vadd.f32 0.0, %v1522
        %v1524 = vpop.f32.mrb[0].mxu0
        %v1525 = vpop.f32.mrb[0].mxu0
        %v1526 = vadd.f32 0.0, %v1525
        %v1527 = vpop.f32.mrb[0].mxu0
        %1528 = vdwg.mxu0
        %v1530 = vsel %vm1387, %v922, 0
        %v1533 = vsel %vm1387, %v1154, 0
        %1535 = vmatprep.subr.bf16.mxu0 0
        %1536 = vmatpush1.bf16.xpose.msra.mxu0 %v1533
        %1537 = vmatprep.subr.bf16.mxu0 0
        %1538 = vmatpush1.bf16.xpose.msra.mxu0 0
        %1539 = vmatprep.subr.bf16.mxu0 0
        %1540 = vmatpush1.bf16.xpose.msra.mxu0 0
        %1541 = vmatprep.subr.bf16.mxu0 0
        %1542 = vmatpush1.bf16.xpose.msra.mxu0 0
        %1543 = vmatprep.subr.bf16.mxu0 0
        %1544 = vmatpush1.bf16.xpose.msra.mxu0 0
        %1545 = vmatprep.subr.bf16.mxu0 0
        %1546 = vmatpush1.bf16.xpose.msra.mxu0 0
        %1547 = vmatprep.subr.bf16.mxu0 0
        %1548 = vmatpush1.bf16.xpose.msra.mxu0 0
        %1549 = vmatprep.subr.bf16.mxu0 0
        %1550 = vmatpush1.bf16.xpose.msra.mxu0 0
        %1551 = vmatprep.subr.bf16.mxu0 0
        %1552 = vmatpush1.bf16.xpose.msra.mxu0 0
        %1553 = vmatprep.subr.bf16.mxu0 0
        %1554 = vmatpush1.bf16.xpose.msra.mxu0 0
        %1555 = vmatprep.subr.bf16.mxu0 0
        %1556 = vmatpush1.bf16.xpose.msra.mxu0 0
        %1557 = vmatprep.subr.bf16.mxu0 0
        %1558 = vmatpush1.bf16.xpose.msra.mxu0 0
        %1559 = vmatprep.subr.bf16.mxu0 0
        %1560 = vmatpush1.bf16.xpose.msra.mxu0 0
        %1561 = vmatprep.subr.bf16.mxu0 0
        %1562 = vmatpush1.bf16.xpose.msra.mxu0 0
        %1563 = vmatprep.subr.bf16.mxu0 0
        %1564 = vmatpush1.bf16.xpose.msra.mxu0 0
        %1565 = vmatprep.subr.bf16.mxu0 0
        %1566 = vmatpush1.bf16.xpose.msra.mxu0 0
        %1567 = vmatprep.mubr.bf16.mxu0 0
        %1568 = vmatmul.mubr.bf16.gmra.mrb[0].mxu0 %v1530
        %v1569 = vpop.f32.mrb[0].mxu0
        %v1570 = vadd.f32 0.0, %v1569
        %v1571 = vpop.f32.mrb[0].mxu0
        %v1572 = vpop.f32.mrb[0].mxu0
        %v1573 = vadd.f32 0.0, %v1572
        %v1574 = vpop.f32.mrb[0].mxu0
        %1575 = vdwg.mxu0
        %vm1576 = vcmask 97280
        %v1577 = vsel %vm1576, %v1429, -inf
        %1578 = vmax.xlane.f32.xlu0 %v1577
        %v1579 = vpop.xlane.xlu0 %1578
        %vm1580 = vcmask 93184
        %v1581 = vsel %vm1580, %v1432, -inf
        %1582 = vmax.xlane.f32.xlu0 %v1581
        %v1583 = vpop.xlane.xlu0 %1582
        %v1584 = vsel %vm1576, %v1476, -inf
        %1585 = vmax.xlane.f32.xlu0 %v1584
        %v1586 = vpop.xlane.xlu0 %1585
        %v1587 = vsel %vm1580, %v1479, -inf
        %1588 = vmax.xlane.f32.xlu0 %v1587
        %v1589 = vpop.xlane.xlu0 %1588
        %v1590 = vsel %vm1576, %v1523, -inf
        %1591 = vmax.xlane.f32.xlu0 %v1590
        %v1592 = vpop.xlane.xlu0 %1591
        %v1593 = vsel %vm1580, %v1526, -inf
        %1594 = vmax.xlane.f32.xlu0 %v1593
        %v1595 = vpop.xlane.xlu0 %1594
        %v1596 = vsel %vm1576, %v1570, -inf
        %1597 = vmax.xlane.f32.xlu0 %v1596
        %v1598 = vpop.xlane.xlu0 %1597
        %v1599 = vsel %vm1580, %v1573, -inf
        %1600 = vmax.xlane.f32.xlu0 %v1599
        %v1601 = vpop.xlane.xlu0 %1600
        %v1602 = vsub.f32 %v1429, %v1579
        %v1603 = vsub.f32 %v1432, %v1583
        %v1604 = vsub.f32 %v1476, %v1586
        %v1605 = vsub.f32 %v1479, %v1589
        %v1606 = vsub.f32 %v1523, %v1592
        %v1607 = vsub.f32 %v1526, %v1595
        %v1608 = vsub.f32 %v1570, %v1598
        %v1609 = vsub.f32 %v1573, %v1601
        %v1610 = vmul.f32 %v1602, 1.442695
        %v1611 = vpow.pop %v1610
        %v1612 = vmul.f32 %v1603, 1.442695
        %v1613 = vpow.pop %v1612
        %v1614 = vmul.f32 %v1604, 1.442695
        %v1615 = vpow.pop %v1614
        %v1616 = vmul.f32 %v1605, 1.442695
        %v1617 = vpow.pop %v1616
        %v1618 = vmul.f32 %v1606, 1.442695
        %v1619 = vpow.pop %v1618
        %v1620 = vmul.f32 %v1607, 1.442695
        %v1621 = vpow.pop %v1620
        %v1622 = vmul.f32 %v1608, 1.442695
        %v1623 = vpow.pop %v1622
        %v1624 = vmul.f32 %v1609, 1.442695
        %v1625 = vpow.pop %v1624
        %v1626 = vsel %vm1576, %v1611, 0.0
        %1627 = vadd.xlane.f32.xlu0 %v1626
        %v1628 = vpop.xlane.xlu0 %1627
        %v1629 = vsel %vm1580, %v1613, 0.0
        %1630 = vadd.xlane.f32.xlu0 %v1629
        %v1631 = vpop.xlane.xlu0 %1630
        %v1632 = vsel %vm1576, %v1615, 0.0
        %1633 = vadd.xlane.f32.xlu0 %v1632
        %v1634 = vpop.xlane.xlu0 %1633
        %v1635 = vsel %vm1580, %v1617, 0.0
        %1636 = vadd.xlane.f32.xlu0 %v1635
        %v1637 = vpop.xlane.xlu0 %1636
        %v1638 = vsel %vm1576, %v1619, 0.0
        %1639 = vadd.xlane.f32.xlu0 %v1638
        %v1640 = vpop.xlane.xlu0 %1639
        %v1641 = vsel %vm1580, %v1621, 0.0
        %1642 = vadd.xlane.f32.xlu0 %v1641
        %v1643 = vpop.xlane.xlu0 %1642
        %v1644 = vsel %vm1576, %v1623, 0.0
        %1645 = vadd.xlane.f32.xlu0 %v1644
        %v1646 = vpop.xlane.xlu0 %1645
        %v1647 = vsel %vm1580, %v1625, 0.0
        %1648 = vadd.xlane.f32.xlu0 %v1647
        %v1649 = vpop.xlane.xlu0 %1648
        %v1650 = vrcp.pop %v1628
        %v1651 = vrcp.pop %v1631
        %v1652 = vrcp.pop %v1634
        %v1653 = vrcp.pop %v1637
        %v1654 = vrcp.pop %v1640
        %v1655 = vrcp.pop %v1643
        %v1656 = vrcp.pop %v1646
        %v1657 = vrcp.pop %v1649
        %v1658 = vmul.f32 %v1611, %v1650
        %v1659 = vmul.f32 %v1613, %v1651
        %v1660 = vmul.f32 %v1615, %v1652
        %v1661 = vmul.f32 %v1617, %v1653
        %v1662 = vmul.f32 %v1619, %v1654
        %v1663 = vmul.f32 %v1621, %v1655
        %v1664 = vmul.f32 %v1623, %v1656
        %v1665 = vmul.f32 %v1625, %v1657
        %v1666 = vpack.c.bf16 %v1659, %v1658
        %v1667 = vpack.c.bf16 %v1661, %v1660
        %v1668 = vpack.c.bf16 %v1663, %v1662
        %v1669 = vpack.c.bf16 %v1665, %v1664
        %v1671 = vsel %vm1576, %v1666, 0
        %vm1673 = vcmask 1045504
        %v1675 = vsel %vm1673, %v1383, 0
        %1677 = vmatprep.subr.bf16.mxu0 0
        %1678 = vmatpush1.bf16.msra.mxu0 %v1675
        %1679 = vmatprep.subr.bf16.mxu0 0
        %1680 = vmatpush1.bf16.msra.mxu0 0
        %1681 = vmatprep.subr.bf16.mxu0 0
        %1682 = vmatpush1.bf16.msra.mxu0 0
        %1683 = vmatprep.subr.bf16.mxu0 0
        %1684 = vmatpush1.bf16.msra.mxu0 0
        %1685 = vmatprep.subr.bf16.mxu0 0
        %1686 = vmatpush1.bf16.msra.mxu0 0
        %1687 = vmatprep.subr.bf16.mxu0 0
        %1688 = vmatpush1.bf16.msra.mxu0 0
        %1689 = vmatprep.subr.bf16.mxu0 0
        %1690 = vmatpush1.bf16.msra.mxu0 0
        %1691 = vmatprep.subr.bf16.mxu0 0
        %1692 = vmatpush1.bf16.msra.mxu0 0
        %1693 = vmatprep.subr.bf16.mxu0 0
        %1694 = vmatpush1.bf16.msra.mxu0 0
        %1695 = vmatprep.subr.bf16.mxu0 0
        %1696 = vmatpush1.bf16.msra.mxu0 0
        %1697 = vmatprep.subr.bf16.mxu0 0
        %1698 = vmatpush1.bf16.msra.mxu0 0
        %1699 = vmatprep.subr.bf16.mxu0 0
        %1700 = vmatpush1.bf16.msra.mxu0 0
        %1701 = vmatprep.subr.bf16.mxu0 0
        %1702 = vmatpush1.bf16.msra.mxu0 0
        %1703 = vmatprep.subr.bf16.mxu0 0
        %1704 = vmatpush1.bf16.msra.mxu0 0
        %1705 = vmatprep.subr.bf16.mxu0 0
        %1706 = vmatpush1.bf16.msra.mxu0 0
        %1707 = vmatprep.subr.bf16.mxu0 0
        %1708 = vmatpush1.bf16.msra.mxu0 0
        %1709 = vmatprep.mubr.bf16.mxu0 0
        %1710 = vmatmul.mubr.bf16.gmra.mrb[0].mxu0 %v1671
        %v1711 = vpop.f32.mrb[0].mxu0
        %v1712 = vadd.f32 0.0, %v1711
        %v1713 = vpop.f32.mrb[0].mxu0
        %v1714 = vpop.f32.mrb[0].mxu0
        %v1715 = vadd.f32 0.0, %v1714
        %v1716 = vpop.f32.mrb[0].mxu0
        %1717 = vdwg.mxu0
        %v1719 = vsel %vm1576, %v1667, 0
        %v1722 = vsel %vm1673, %v1384, 0
        %1724 = vmatprep.subr.bf16.mxu0 0
        %1725 = vmatpush1.bf16.msra.mxu0 %v1722
        %1726 = vmatprep.subr.bf16.mxu0 0
        %1727 = vmatpush1.bf16.msra.mxu0 0
        %1728 = vmatprep.subr.bf16.mxu0 0
        %1729 = vmatpush1.bf16.msra.mxu0 0
        %1730 = vmatprep.subr.bf16.mxu0 0
        %1731 = vmatpush1.bf16.msra.mxu0 0
        %1732 = vmatprep.subr.bf16.mxu0 0
        %1733 = vmatpush1.bf16.msra.mxu0 0
        %1734 = vmatprep.subr.bf16.mxu0 0
        %1735 = vmatpush1.bf16.msra.mxu0 0
        %1736 = vmatprep.subr.bf16.mxu0 0
        %1737 = vmatpush1.bf16.msra.mxu0 0
        %1738 = vmatprep.subr.bf16.mxu0 0
        %1739 = vmatpush1.bf16.msra.mxu0 0
        %1740 = vmatprep.subr.bf16.mxu0 0
        %1741 = vmatpush1.bf16.msra.mxu0 0
        %1742 = vmatprep.subr.bf16.mxu0 0
        %1743 = vmatpush1.bf16.msra.mxu0 0
        %1744 = vmatprep.subr.bf16.mxu0 0
        %1745 = vmatpush1.bf16.msra.mxu0 0
        %1746 = vmatprep.subr.bf16.mxu0 0
        %1747 = vmatpush1.bf16.msra.mxu0 0
        %1748 = vmatprep.subr.bf16.mxu0 0
        %1749 = vmatpush1.bf16.msra.mxu0 0
        %1750 = vmatprep.subr.bf16.mxu0 0
        %1751 = vmatpush1.bf16.msra.mxu0 0
        %1752 = vmatprep.subr.bf16.mxu0 0
        %1753 = vmatpush1.bf16.msra.mxu0 0
        %1754 = vmatprep.subr.bf16.mxu0 0
        %1755 = vmatpush1.bf16.msra.mxu0 0
        %1756 = vmatprep.mubr.bf16.mxu0 0
        %1757 = vmatmul.mubr.bf16.gmra.mrb[0].mxu0 %v1719
        %v1758 = vpop.f32.mrb[0].mxu0
        %v1759 = vadd.f32 0.0, %v1758
        %v1760 = vpop.f32.mrb[0].mxu0
        %v1761 = vpop.f32.mrb[0].mxu0
        %v1762 = vadd.f32 0.0, %v1761
        %v1763 = vpop.f32.mrb[0].mxu0
        %1764 = vdwg.mxu0
        %v1766 = vsel %vm1576, %v1668, 0
        %v1769 = vsel %vm1673, %v1385, 0
        %1771 = vmatprep.subr.bf16.mxu0 0
        %1772 = vmatpush1.bf16.msra.mxu0 %v1769
        %1773 = vmatprep.subr.bf16.mxu0 0
        %1774 = vmatpush1.bf16.msra.mxu0 0
        %1775 = vmatprep.subr.bf16.mxu0 0
        %1776 = vmatpush1.bf16.msra.mxu0 0
        %1777 = vmatprep.subr.bf16.mxu0 0
        %1778 = vmatpush1.bf16.msra.mxu0 0
        %1779 = vmatprep.subr.bf16.mxu0 0
        %1780 = vmatpush1.bf16.msra.mxu0 0
        %1781 = vmatprep.subr.bf16.mxu0 0
        %1782 = vmatpush1.bf16.msra.mxu0 0
        %1783 = vmatprep.subr.bf16.mxu0 0
        %1784 = vmatpush1.bf16.msra.mxu0 0
        %1785 = vmatprep.subr.bf16.mxu0 0
        %1786 = vmatpush1.bf16.msra.mxu0 0
        %1787 = vmatprep.subr.bf16.mxu0 0
        %1788 = vmatpush1.bf16.msra.mxu0 0
        %1789 = vmatprep.subr.bf16.mxu0 0
        %1790 = vmatpush1.bf16.msra.mxu0 0
        %1791 = vmatprep.subr.bf16.mxu0 0
        %1792 = vmatpush1.bf16.msra.mxu0 0
        %1793 = vmatprep.subr.bf16.mxu0 0
        %1794 = vmatpush1.bf16.msra.mxu0 0
        %1795 = vmatprep.subr.bf16.mxu0 0
        %1796 = vmatpush1.bf16.msra.mxu0 0
        %1797 = vmatprep.subr.bf16.mxu0 0
        %1798 = vmatpush1.bf16.msra.mxu0 0
        %1799 = vmatprep.subr.bf16.mxu0 0
        %1800 = vmatpush1.bf16.msra.mxu0 0
        %1801 = vmatprep.subr.bf16.mxu0 0
        %1802 = vmatpush1.bf16.msra.mxu0 0
        %1803 = vmatprep.mubr.bf16.mxu0 0
        %1804 = vmatmul.mubr.bf16.gmra.mrb[0].mxu0 %v1766
        %v1805 = vpop.f32.mrb[0].mxu0
        %v1806 = vadd.f32 0.0, %v1805
        %v1807 = vpop.f32.mrb[0].mxu0
        %v1808 = vpop.f32.mrb[0].mxu0
        %v1809 = vadd.f32 0.0, %v1808
        %v1810 = vpop.f32.mrb[0].mxu0
        %1811 = vdwg.mxu0
        %v1813 = vsel %vm1576, %v1669, 0
        %v1816 = vsel %vm1673, %v1386, 0
        %1818 = vmatprep.subr.bf16.mxu0 0
        %1819 = vmatpush1.bf16.msra.mxu0 %v1816
        %1820 = vmatprep.subr.bf16.mxu0 0
        %1821 = vmatpush1.bf16.msra.mxu0 0
        %1822 = vmatprep.subr.bf16.mxu0 0
        %1823 = vmatpush1.bf16.msra.mxu0 0
        %1824 = vmatprep.subr.bf16.mxu0 0
        %1825 = vmatpush1.bf16.msra.mxu0 0
        %1826 = vmatprep.subr.bf16.mxu0 0
        %1827 = vmatpush1.bf16.msra.mxu0 0
        %1828 = vmatprep.subr.bf16.mxu0 0
        %1829 = vmatpush1.bf16.msra.mxu0 0
        %1830 = vmatprep.subr.bf16.mxu0 0
        %1831 = vmatpush1.bf16.msra.mxu0 0
        %1832 = vmatprep.subr.bf16.mxu0 0
        %1833 = vmatpush1.bf16.msra.mxu0 0
        %1834 = vmatprep.subr.bf16.mxu0 0
        %1835 = vmatpush1.bf16.msra.mxu0 0
        %1836 = vmatprep.subr.bf16.mxu0 0
        %1837 = vmatpush1.bf16.msra.mxu0 0
        %1838 = vmatprep.subr.bf16.mxu0 0
        %1839 = vmatpush1.bf16.msra.mxu0 0
        %1840 = vmatprep.subr.bf16.mxu0 0
        %1841 = vmatpush1.bf16.msra.mxu0 0
        %1842 = vmatprep.subr.bf16.mxu0 0
        %1843 = vmatpush1.bf16.msra.mxu0 0
        %1844 = vmatprep.subr.bf16.mxu0 0
        %1845 = vmatpush1.bf16.msra.mxu0 0
        %1846 = vmatprep.subr.bf16.mxu0 0
        %1847 = vmatpush1.bf16.msra.mxu0 0
        %1848 = vmatprep.subr.bf16.mxu0 0
        %1849 = vmatpush1.bf16.msra.mxu0 0
        %1850 = vmatprep.mubr.bf16.mxu0 0
        %1851 = vmatmul.mubr.bf16.gmra.mrb[0].mxu0 %v1813
        %v1852 = vpop.f32.mrb[0].mxu0
        %v1853 = vadd.f32 0.0, %v1852
        %v1854 = vpop.f32.mrb[0].mxu0
        %v1855 = vpop.f32.mrb[0].mxu0
        %v1856 = vadd.f32 0.0, %v1855
        %v1857 = vpop.f32.mrb[0].mxu0
        %1858 = vdwg.mxu0
        %v1859 = vcombine.low %v1712, %v1806
        %v1860 = vcombine.high %v1712, %v1806
        %v1862 = vunpack.c.l.s4 1983009808
        %v1863 = vunpack.c.0.s8 %v1862
        %v1864 = vlaneseq
        %v1865 = vshrl.u32 %v1864, 7
        %v1866 = vsub.s32 %v1863, %v1865
        %v1867 = vrot.slane %v1859, %v1866
        %v1869 = vunpack.c.l.s4 1983009808
        %v1870 = vunpack.c.0.s8 %v1869
        %v1871 = vlaneseq
        %v1872 = vshrl.u32 %v1871, 7
        %v1873 = vsub.s32 %v1870, %v1872
        %v1874 = vrot.slane %v1860, %v1873
        %v1875 = vcombine.low %v1759, %v1853
        %v1876 = vcombine.high %v1759, %v1853
        %v1878 = vunpack.c.l.s4 1983009808
        %v1879 = vunpack.c.0.s8 %v1878
        %v1880 = vlaneseq
        %v1881 = vshrl.u32 %v1880, 7
        %v1882 = vsub.s32 %v1879, %v1881
        %v1883 = vrot.slane %v1875, %v1882
        %v1885 = vunpack.c.l.s4 1983009808
        %v1886 = vunpack.c.0.s8 %v1885
        %v1887 = vlaneseq
        %v1888 = vshrl.u32 %v1887, 7
        %v1889 = vsub.s32 %v1886, %v1888
        %v1890 = vrot.slane %v1876, %v1889
        %v1891 = vcombine.low %v1867, %v1883
        %v1892 = vcombine.high %v1867, %v1883
        %v1894 = vunpack.c.l.s4 1934713408
        %v1895 = vunpack.c.0.s8 %v1894
        %v1896 = vlaneseq
        %v1897 = vshrl.u32 %v1896, 7
        %v1898 = vsub.s32 %v1895, %v1897
        %v1899 = vrot.slane %v1891, %v1898
        %v1901 = vunpack.c.l.s4 1934713408
        %v1902 = vunpack.c.0.s8 %v1901
        %v1903 = vlaneseq
        %v1904 = vshrl.u32 %v1903, 7
        %v1905 = vsub.s32 %v1902, %v1904
        %v1906 = vrot.slane %v1892, %v1905
        %v1907 = vcombine.low %v1874, %v1890
        %v1908 = vcombine.high %v1874, %v1890
        %v1910 = vunpack.c.l.s4 1934713408
        %v1911 = vunpack.c.0.s8 %v1910
        %v1912 = vlaneseq
        %v1913 = vshrl.u32 %v1912, 7
        %v1914 = vsub.s32 %v1911, %v1913
        %v1915 = vrot.slane %v1907, %v1914
        %v1917 = vunpack.c.l.s4 1934713408
        %v1918 = vunpack.c.0.s8 %v1917
        %v1919 = vlaneseq
        %v1920 = vshrl.u32 %v1919, 7
        %v1921 = vsub.s32 %v1918, %v1920
        %v1922 = vrot.slane %v1908, %v1921
        %v1923 = vcombine.high %v1899, 0.0
        %v1924 = vcombine.high %v1906, 0.0
        %v1925 = vcombine.high %v1915, 0.0
        %v1926 = vcombine.high %v1922, 0.0
        %v1927 = vcombine.low %v1715, %v1809
        %v1929 = vunpack.c.l.s4 1983009808
        %v1930 = vunpack.c.0.s8 %v1929
        %v1931 = vlaneseq
        %v1932 = vshrl.u32 %v1931, 7
        %v1933 = vsub.s32 %v1930, %v1932
        %v1934 = vrot.slane %v1927, %v1933
        %v1935 = vcombine.low %v1762, %v1856
        %v1937 = vunpack.c.l.s4 1983009808
        %v1938 = vunpack.c.0.s8 %v1937
        %v1939 = vlaneseq
        %v1940 = vshrl.u32 %v1939, 7
        %v1941 = vsub.s32 %v1938, %v1940
        %v1942 = vrot.slane %v1935, %v1941
        %v1943 = vcombine.low %v1934, %v1942
        %v1944 = vcombine.high %v1934, %v1942
        %v1946 = vunpack.c.l.s4 1934713408
        %v1947 = vunpack.c.0.s8 %v1946
        %v1948 = vlaneseq
        %v1949 = vshrl.u32 %v1948, 7
        %v1950 = vsub.s32 %v1947, %v1949
        %v1951 = vrot.slane %v1943, %v1950
        %v1953 = vunpack.c.l.s4 1934713408
        %v1954 = vunpack.c.0.s8 %v1953
        %v1955 = vlaneseq
        %v1956 = vshrl.u32 %v1955, 7
        %v1957 = vsub.s32 %v1954, %v1956
        %v1958 = vrot.slane %v1944, %v1957
        %v1959 = vcombine.high %v1951, 0.0
        %v1960 = vcombine.high %v1958, 0.0
        %v1961 = vcombine.low %v1899, %v1906
        %v1963 = vunpack.c.l.s4 1983009808
        %v1964 = vunpack.c.0.s8 %v1963
        %v1965 = vlaneseq
        %v1966 = vshrl.u32 %v1965, 7
        %v1967 = vsub.s32 %v1964, %v1966
        %v1968 = vrot.slane %v1961, %v1967
        %v1969 = vcombine.low %v1923, %v1924
        %v1971 = vunpack.c.l.s4 1983009808
        %v1972 = vunpack.c.0.s8 %v1971
        %v1973 = vlaneseq
        %v1974 = vshrl.u32 %v1973, 7
        %v1975 = vsub.s32 %v1972, %v1974
        %v1976 = vrot.slane %v1969, %v1975
        %v1977 = vcombine.low %v1915, %v1922
        %v1979 = vunpack.c.l.s4 1983009808
        %v1980 = vunpack.c.0.s8 %v1979
        %v1981 = vlaneseq
        %v1982 = vshrl.u32 %v1981, 7
        %v1983 = vsub.s32 %v1980, %v1982
        %v1984 = vrot.slane %v1977, %v1983
        %v1985 = vcombine.low %v1925, %v1926
        %v1987 = vunpack.c.l.s4 1983009808
        %v1988 = vunpack.c.0.s8 %v1987
        %v1989 = vlaneseq
        %v1990 = vshrl.u32 %v1989, 7
        %v1991 = vsub.s32 %v1988, %v1990
        %v1992 = vrot.slane %v1985, %v1991
        %v1993 = vcombine.low %v1968, %v1976
        %v1994 = vcombine.high %v1968, %v1976
        %v1996 = vunpack.c.l.s4 1934713408
        %v1997 = vunpack.c.0.s8 %v1996
        %v1998 = vlaneseq
        %v1999 = vshrl.u32 %v1998, 7
        %v2000 = vsub.s32 %v1997, %v1999
        %v2001 = vrot.slane %v1993, %v2000
        %v2003 = vunpack.c.l.s4 1934713408
        %v2004 = vunpack.c.0.s8 %v2003
        %v2005 = vlaneseq
        %v2006 = vshrl.u32 %v2005, 7
        %v2007 = vsub.s32 %v2004, %v2006
        %v2008 = vrot.slane %v1994, %v2007
        %v2009 = vcombine.low %v1984, %v1992
        %v2010 = vcombine.high %v1984, %v1992
        %v2012 = vunpack.c.l.s4 1934713408
        %v2013 = vunpack.c.0.s8 %v2012
        %v2014 = vlaneseq
        %v2015 = vshrl.u32 %v2014, 7
        %v2016 = vsub.s32 %v2013, %v2015
        %v2017 = vrot.slane %v2009, %v2016
        %v2019 = vunpack.c.l.s4 1934713408
        %v2020 = vunpack.c.0.s8 %v2019
        %v2021 = vlaneseq
        %v2022 = vshrl.u32 %v2021, 7
        %v2023 = vsub.s32 %v2020, %v2022
        %v2024 = vrot.slane %v2010, %v2023
        %v2025 = vcombine.low %v2001, %v2017
        %v2026 = vcombine.high %v2001, %v2017
        %v2027 = vcombine.low %v2008, %v2024
        %v2028 = vcombine.high %v2008, %v2024
        %v2029 = vcombine.low %v1951, %v1958
        %v2031 = vunpack.c.l.s4 1983009808
        %v2032 = vunpack.c.0.s8 %v2031
        %v2033 = vlaneseq
        %v2034 = vshrl.u32 %v2033, 7
        %v2035 = vsub.s32 %v2032, %v2034
        %v2036 = vrot.slane %v2029, %v2035
        %v2037 = vcombine.low %v1959, %v1960
        %v2039 = vunpack.c.l.s4 1983009808
        %v2040 = vunpack.c.0.s8 %v2039
        %v2041 = vlaneseq
        %v2042 = vshrl.u32 %v2041, 7
        %v2043 = vsub.s32 %v2040, %v2042
        %v2044 = vrot.slane %v2037, %v2043
        %v2045 = vcombine.low %v2036, %v2044
        %v2046 = vcombine.high %v2036, %v2044
        %v2048 = vunpack.c.l.s4 1934713408
        %v2049 = vunpack.c.0.s8 %v2048
        %v2050 = vlaneseq
        %v2051 = vshrl.u32 %v2050, 7
        %v2052 = vsub.s32 %v2049, %v2051
        %v2053 = vrot.slane %v2045, %v2052
        %v2055 = vunpack.c.l.s4 1934713408
        %v2056 = vunpack.c.0.s8 %v2055
        %v2057 = vlaneseq
        %v2058 = vshrl.u32 %v2057, 7
        %v2059 = vsub.s32 %v2056, %v2058
        %v2060 = vrot.slane %v2046, %v2059
        %v2061 = vcombine.high %v2053, 0.0
        %v2062 = vcombine.high %v2060, 0.0
        %2065 = vrot.lane.b32.xlu0 %v2026, 8
        %v2066 = vpop.permute.xlu0 %2065
        %2067 = vrot.lane.b32.xlu0 %v2061, 8
        %v2068 = vpop.permute.xlu0 %2067
        %2073 = vrot.lane.b32.xlu0 %v2027, 16
        %v2074 = vpop.permute.xlu0 %2073
        %2075 = vrot.lane.b32.xlu0 %v2060, 16
        %v2076 = vpop.permute.xlu0 %2075
        %2081 = vrot.lane.b32.xlu0 %v2028, 24
        %v2082 = vpop.permute.xlu0 %2081
        %2083 = vrot.lane.b32.xlu0 %v2062, 24
        %v2084 = vpop.permute.xlu0 %2083
        %v2087 = vsel %vm1387, %v2025, %v2066
        %v2088 = vsel %vm1387, %v2053, %v2068
        %vm2089 = vcmask 130048
        %v2090 = vsel %vm2089, %v2087, %v2074
        %v2091 = vsel %vm2089, %v2088, %v2076
        %vm2092 = vcmask 195584
        %v2093 = vsel %vm2092, %v2090, %v2082
        %v2094 = vsel %vm2092, %v2091, %v2084
        %v2095 = vpack.c.bf16 %v2094, %v2093
        %v2096 = vld [vmem:[#allocation8] sm:$0xf]
        %v2097 = vld [vmem:[#allocation8 + $0x4] sm:$0xf]
        %v2098 = vld [vmem:[#allocation8 + $0x8] sm:$0xf]
        %v2099 = vld [vmem:[#allocation8 + $0xc] sm:$0xf]
        %v2100 = vld [vmem:[#allocation10] sm:$0x1]
        %v2102 = vlaneseq
        %v2103 = vshrl.u32 %v2102, 7
        %v2104 = vsub.s32 0, %v2103
        %v2105 = vrot.slane %v2100, %v2104
        %v2111 = vunpack.c.l.b16 %v2096
        %v2112 = vunpack.c.l.b16 %v2097
        %v2113 = vunpack.c.l.b16 %v2098
        %v2114 = vunpack.c.l.b16 %v2099
        %v2115 = vpack.c.b16 %v2112, %v2111
        %v2116 = vpack.c.b16 %v2114, %v2113
        %v2120 = vsel %vm650, %v2095, 0
        %2122 = vmatprep.subr.bf16.mxu0 0
        %2123 = vmatpush1.bf16.msra.mxu0 %v2115
        %2124 = vmatprep.subr.bf16.mxu0 0
        %2125 = vmatpush1.bf16.msra.mxu0 %v2116
        %2126 = vmatprep.subr.bf16.mxu0 0
        %2127 = vmatpush1.bf16.msra.mxu0 0
        %2128 = vmatprep.subr.bf16.mxu0 0
        %2129 = vmatpush1.bf16.msra.mxu0 0
        %2130 = vmatprep.subr.bf16.mxu0 0
        %2131 = vmatpush1.bf16.msra.mxu0 0
        %2132 = vmatprep.subr.bf16.mxu0 0
        %2133 = vmatpush1.bf16.msra.mxu0 0
        %2134 = vmatprep.subr.bf16.mxu0 0
        %2135 = vmatpush1.bf16.msra.mxu0 0
        %2136 = vmatprep.subr.bf16.mxu0 0
        %2137 = vmatpush1.bf16.msra.mxu0 0
        %2138 = vmatprep.subr.bf16.mxu0 0
        %2139 = vmatpush1.bf16.msra.mxu0 0
        %2140 = vmatprep.subr.bf16.mxu0 0
        %2141 = vmatpush1.bf16.msra.mxu0 0
        %2142 = vmatprep.subr.bf16.mxu0 0
        %2143 = vmatpush1.bf16.msra.mxu0 0
        %2144 = vmatprep.subr.bf16.mxu0 0
        %2145 = vmatpush1.bf16.msra.mxu0 0
        %2146 = vmatprep.subr.bf16.mxu0 0
        %2147 = vmatpush1.bf16.msra.mxu0 0
        %2148 = vmatprep.subr.bf16.mxu0 0
        %2149 = vmatpush1.bf16.msra.mxu0 0
        %2150 = vmatprep.subr.bf16.mxu0 0
        %2151 = vmatpush1.bf16.msra.mxu0 0
        %2152 = vmatprep.subr.bf16.mxu0 0
        %2153 = vmatpush1.bf16.msra.mxu0 0
        %2154 = vmatprep.mubr.bf16.mxu0 0
        %2155 = vmatmul.mubr.bf16.gmra.mrb[0].mxu0 %v2120
        %v2156 = vpop.f32.mrb[0].mxu0
        %v2157 = vadd.f32 %v2105, %v2156
        %v2158 = vpop.f32.mrb[0].mxu0
        %v2159 = vpop.f32.mrb[0].mxu0
        %v2160 = vadd.f32 %v2105, %v2159
        %v2161 = vpop.f32.mrb[0].mxu0
        %2162 = vdwg.mxu0
        %v2163 = vadd.f32 %v620, %v2157
        %v2164 = vadd.f32 %v621, %v2160
        %v2165 = vld [vmem:[#allocation11] sm:$0x1]
        %v2166 = vld [vmem:[#allocation13] sm:$0x1]
        %v2167 = vsel %vm650, %v2163, 0.0
        %2168 = vadd.xlane.f32.xlu0 %v2167
        %v2169 = vpop.xlane.xlu0 %2168
        %vm2170 = vcmask 257024
        %v2171 = vsel %vm2170, %v2164, 0.0
        %2172 = vadd.xlane.f32.xlu0 %v2171
        %v2173 = vpop.xlane.xlu0 %2172
        %v2174 = vrcp.pop 32.0
        %v2175 = vmul.f32 %v2169, %v2174
        %v2176 = vmul.f32 %v2173, %v2174
        %v2177 = vsub.f32 %v2163, %v2175
        %v2178 = vsub.f32 %v2164, %v2176
        %v2179 = vmul.f32 %v2177, %v2177
        %v2180 = vmul.f32 %v2178, %v2178
        %v2181 = vsel %vm650, %v2179, 0.0
        %2182 = vadd.xlane.f32.xlu0 %v2181
        %v2183 = vpop.xlane.xlu0 %2182
        %v2184 = vsel %vm2170, %v2180, 0.0
        %2185 = vadd.xlane.f32.xlu0 %v2184
        %v2186 = vpop.xlane.xlu0 %2185
        %v2187 = vmul.f32 %v2183, %v2174
        %v2188 = vmul.f32 %v2186, %v2174
        %v2189 = vadd.f32 %v2187, 1e-12
        %v2190 = vadd.f32 %v2188, 1e-12
        %v2191 = vrsqrt.pop %v2189
        %v2192 = vrsqrt.pop %v2190
        %v2193 = vmul.f32 %v2177, %v2191
        %v2194 = vmul.f32 %v2178, %v2192
        %v2196 = vlaneseq
        %v2197 = vshrl.u32 %v2196, 7
        %v2198 = vsub.s32 0, %v2197
        %v2199 = vrot.slane %v2165, %v2198
        %v2201 = vmul.f32 %v2193, %v2199
        %v2202 = vmul.f32 %v2194, %v2199
        %v2204 = vlaneseq
        %v2205 = vshrl.u32 %v2204, 7
        %v2206 = vsub.s32 0, %v2205
        %v2207 = vrot.slane %v2166, %v2206
        %v2209 = vadd.f32 %v2201, %v2207
        %v2210 = vadd.f32 %v2202, %v2207
        %v2211 = vpack.c.bf16 %v2210, %v2209
        %v2212 = vld [vmem:[#allocation14] sm:$0xf]
        %v2213 = vld [vmem:[#allocation14 + $0x4] sm:$0xf]
        %v2214 = vld [vmem:[#allocation14 + $0x8] sm:$0xf]
        %v2215 = vld [vmem:[#allocation14 + $0xc] sm:$0xf]
        %v2216 = vld [vmem:[#allocation16] sm:$0x1]
        %v2218 = vlaneseq
        %v2219 = vshrl.u32 %v2218, 7
        %v2220 = vsub.s32 0, %v2219
        %v2221 = vrot.slane %v2216, %v2220
        %v2227 = vunpack.c.l.b16 %v2212
        %v2228 = vunpack.c.l.b16 %v2213
        %v2229 = vunpack.c.l.b16 %v2214
        %v2230 = vunpack.c.l.b16 %v2215
        %v2231 = vpack.c.b16 %v2228, %v2227
        %v2232 = vpack.c.b16 %v2230, %v2229
        %v2236 = vsel %vm650, %v2211, 0
        %2238 = vmatprep.subr.bf16.mxu0 0
        %2239 = vmatpush1.bf16.msra.mxu0 %v2231
        %2240 = vmatprep.subr.bf16.mxu0 0
        %2241 = vmatpush1.bf16.msra.mxu0 %v2232
        %2242 = vmatprep.subr.bf16.mxu0 0
        %2243 = vmatpush1.bf16.msra.mxu0 0
        %2244 = vmatprep.subr.bf16.mxu0 0
        %2245 = vmatpush1.bf16.msra.mxu0 0
        %2246 = vmatprep.subr.bf16.mxu0 0
        %2247 = vmatpush1.bf16.msra.mxu0 0
        %2248 = vmatprep.subr.bf16.mxu0 0
        %2249 = vmatpush1.bf16.msra.mxu0 0
        %2250 = vmatprep.subr.bf16.mxu0 0
        %2251 = vmatpush1.bf16.msra.mxu0 0
        %2252 = vmatprep.subr.bf16.mxu0 0
        %2253 = vmatpush1.bf16.msra.mxu0 0
        %2254 = vmatprep.subr.bf16.mxu0 0
        %2255 = vmatpush1.bf16.msra.mxu0 0
        %2256 = vmatprep.subr.bf16.mxu0 0
        %2257 = vmatpush1.bf16.msra.mxu0 0
        %2258 = vmatprep.subr.bf16.mxu0 0
        %2259 = vmatpush1.bf16.msra.mxu0 0
        %2260 = vmatprep.subr.bf16.mxu0 0
        %2261 = vmatpush1.bf16.msra.mxu0 0
        %2262 = vmatprep.subr.bf16.mxu0 0
        %2263 = vmatpush1.bf16.msra.mxu0 0
        %2264 = vmatprep.subr.bf16.mxu0 0
        %2265 = vmatpush1.bf16.msra.mxu0 0
        %2266 = vmatprep.subr.bf16.mxu0 0
        %2267 = vmatpush1.bf16.msra.mxu0 0
        %2268 = vmatprep.subr.bf16.mxu0 0
        %2269 = vmatpush1.bf16.msra.mxu0 0
        %2270 = vmatprep.mubr.bf16.mxu0 0
        %2271 = vmatmul.mubr.bf16.gmra.mrb[0].mxu0 %v2236
        %v2272 = vpop.f32.mrb[0].mxu0
        %v2273 = vadd.f32 %v2221, %v2272
        %v2274 = vpop.f32.mrb[0].mxu0
        %v2275 = vpop.f32.mrb[0].mxu0
        %v2276 = vadd.f32 %v2221, %v2275
        %v2277 = vpop.f32.mrb[0].mxu0
        %2278 = vdwg.mxu0
        %v2279 = vmul.f32 %v2273, 0.5
        %v2280 = vmul.f32 %v2276, 0.5
        %v2281 = vmul.f32 %v2273, 0.044715
        %v2282 = vmul.f32 %v2276, 0.044715
        %v2283 = vmul.f32 %v2281, %v2273
        %v2284 = vmul.f32 %v2282, %v2276
        %v2285 = vmul.f32 %v2283, %v2273
        %v2286 = vmul.f32 %v2284, %v2276
        %v2287 = vadd.f32 %v2273, %v2285
        %v2288 = vadd.f32 %v2276, %v2286
        %v2289 = vmul.f32 %v2287, 0.7978846
        %v2290 = vmul.f32 %v2288, 0.7978846
        %v2291 = vtanh.pop %v2289
        %v2292 = vtanh.pop %v2290
        %v2293 = vadd.f32 %v2291, 1.0
        %v2294 = vadd.f32 %v2292, 1.0
        %v2295 = vmul.f32 %v2279, %v2293
        %v2296 = vmul.f32 %v2280, %v2294
        %v2297 = vpack.c.bf16 %v2296, %v2295
        %v2298 = vld [vmem:[#allocation17] sm:$0xf]
        %v2299 = vld [vmem:[#allocation17 + $0x4] sm:$0xf]
        %v2300 = vld [vmem:[#allocation17 + $0x8] sm:$0xf]
        %v2301 = vld [vmem:[#allocation17 + $0xc] sm:$0xf]
        %v2302 = vld [vmem:[#allocation17 + $0x10] sm:$0xf]
        %v2303 = vld [vmem:[#allocation17 + $0x14] sm:$0xf]
        %v2304 = vld [vmem:[#allocation17 + $0x18] sm:$0xf]
        %v2305 = vld [vmem:[#allocation17 + $0x1c] sm:$0xf]
        %v2306 = vld [vmem:[#allocation19] sm:$0x1]
        %v2308 = vlaneseq
        %v2309 = vshrl.u32 %v2308, 7
        %v2310 = vsub.s32 0, %v2309
        %v2311 = vrot.slane %v2306, %v2310
        %v2321 = vunpack.c.l.b16 %v2298
        %v2322 = vunpack.c.l.b16 %v2299
        %v2323 = vunpack.c.l.b16 %v2300
        %v2324 = vunpack.c.l.b16 %v2301
        %v2325 = vunpack.c.l.b16 %v2302
        %v2326 = vunpack.c.l.b16 %v2303
        %v2327 = vunpack.c.l.b16 %v2304
        %v2328 = vunpack.c.l.b16 %v2305
        %v2329 = vpack.c.b16 %v2322, %v2321
        %v2330 = vpack.c.b16 %v2324, %v2323
        %v2331 = vpack.c.b16 %v2326, %v2325
        %v2332 = vpack.c.b16 %v2328, %v2327
        %vm2337 = vcmask 523264
        %v2339 = vsel %vm2337, %v2297, 0
        %2341 = vmatprep.subr.bf16.mxu0 0
        %2342 = vmatpush1.bf16.msra.mxu0 %v2329
        %2343 = vmatprep.subr.bf16.mxu0 0
        %2344 = vmatpush1.bf16.msra.mxu0 %v2330
        %2345 = vmatprep.subr.bf16.mxu0 0
        %2346 = vmatpush1.bf16.msra.mxu0 %v2331
        %2347 = vmatprep.subr.bf16.mxu0 0
        %2348 = vmatpush1.bf16.msra.mxu0 %v2332
        %2349 = vmatprep.subr.bf16.mxu0 0
        %2350 = vmatpush1.bf16.msra.mxu0 0
        %2351 = vmatprep.subr.bf16.mxu0 0
        %2352 = vmatpush1.bf16.msra.mxu0 0
        %2353 = vmatprep.subr.bf16.mxu0 0
        %2354 = vmatpush1.bf16.msra.mxu0 0
        %2355 = vmatprep.subr.bf16.mxu0 0
        %2356 = vmatpush1.bf16.msra.mxu0 0
        %2357 = vmatprep.subr.bf16.mxu0 0
        %2358 = vmatpush1.bf16.msra.mxu0 0
        %2359 = vmatprep.subr.bf16.mxu0 0
        %2360 = vmatpush1.bf16.msra.mxu0 0
        %2361 = vmatprep.subr.bf16.mxu0 0
        %2362 = vmatpush1.bf16.msra.mxu0 0
        %2363 = vmatprep.subr.bf16.mxu0 0
        %2364 = vmatpush1.bf16.msra.mxu0 0
        %2365 = vmatprep.subr.bf16.mxu0 0
        %2366 = vmatpush1.bf16.msra.mxu0 0
        %2367 = vmatprep.subr.bf16.mxu0 0
        %2368 = vmatpush1.bf16.msra.mxu0 0
        %2369 = vmatprep.subr.bf16.mxu0 0
        %2370 = vmatpush1.bf16.msra.mxu0 0
        %2371 = vmatprep.subr.bf16.mxu0 0
        %2372 = vmatpush1.bf16.msra.mxu0 0
        %2373 = vmatprep.mubr.bf16.mxu0 0
        %2374 = vmatmul.mubr.bf16.gmra.mrb[0].mxu0 %v2339
        %v2375 = vpop.f32.mrb[0].mxu0
        %v2376 = vadd.f32 %v2311, %v2375
        %v2377 = vpop.f32.mrb[0].mxu0
        %v2378 = vpop.f32.mrb[0].mxu0
        %v2379 = vadd.f32 %v2311, %v2378
        %v2380 = vpop.f32.mrb[0].mxu0
        %2381 = vdwg.mxu0
        %v2382 = vadd.f32 %v2209, %v2376
        %v2383 = vadd.f32 %v2210, %v2379
        %v2384 = vld [vmem:[#allocation20] sm:$0x1]
        %v2385 = vld [vmem:[#allocation22] sm:$0x1]
        %v2386 = vsel %vm650, %v2382, 0.0
        %2387 = vadd.xlane.f32.xlu0 %v2386
        %v2388 = vpop.xlane.xlu0 %2387
        %v2389 = vsel %vm2170, %v2383, 0.0
        %2390 = vadd.xlane.f32.xlu0 %v2389
        %v2391 = vpop.xlane.xlu0 %2390
        %v2392 = vmul.f32 %v2388, %v2174
        %v2393 = vmul.f32 %v2391, %v2174
        %v2394 = vsub.f32 %v2382, %v2392
        %v2395 = vsub.f32 %v2383, %v2393
        %v2396 = vmul.f32 %v2394, %v2394
        %v2397 = vmul.f32 %v2395, %v2395
        %v2398 = vsel %vm650, %v2396, 0.0
        %2399 = vadd.xlane.f32.xlu0 %v2398
        %v2400 = vpop.xlane.xlu0 %2399
        %v2401 = vsel %vm2170, %v2397, 0.0
        %2402 = vadd.xlane.f32.xlu0 %v2401
        %v2403 = vpop.xlane.xlu0 %2402
        %v2404 = vmul.f32 %v2400, %v2174
        %v2405 = vmul.f32 %v2403, %v2174
        %v2406 = vadd.f32 %v2404, 1e-12
        %v2407 = vadd.f32 %v2405, 1e-12
        %v2408 = vrsqrt.pop %v2406
        %v2409 = vrsqrt.pop %v2407
        %v2410 = vmul.f32 %v2394, %v2408
        %v2411 = vmul.f32 %v2395, %v2409
        %v2413 = vlaneseq
        %v2414 = vshrl.u32 %v2413, 7
        %v2415 = vsub.s32 0, %v2414
        %v2416 = vrot.slane %v2384, %v2415
        %v2418 = vmul.f32 %v2410, %v2416
        %v2419 = vmul.f32 %v2411, %v2416
        %v2421 = vlaneseq
        %v2422 = vshrl.u32 %v2421, 7
        %v2423 = vsub.s32 0, %v2422
        %v2424 = vrot.slane %v2385, %v2423
        %v2426 = vadd.f32 %v2418, %v2424
        %v2427 = vadd.f32 %v2419, %v2424
        %v2428 = vpack.c.bf16 %v2427, %v2426
        %v2430 = vunpack.c.l.b16 %v2428
        %v2431 = vunpack.c.h.b16 %v2428
        %v2432 = vpack.c.b16 %v2430, %v2430
        %v2433 = vpack.c.b16 %v2431, %v2431
        %2436 = vst.msk [vmem:[%s616] sm:$0xf] %vm2170, %v2432
        %vm2437 = vcmask 254976
        %2438 = vst.msk [vmem:[%s616 + $0x4] sm:$0x3] %vm2437, %v2433
        %s2439 = sand.u32 %s322, 1
        %s2440 = scalar_lea.sflag [#allocation4], %s2439
        %s2441 = sand.u32 %s322, 1
        %s2442 = smul.addr %s2441, 8
        %s2443 = scalar_lea.vmem [#allocation23], %s2442
        // Predicated region
        $region125: #{tpu_custom_call.1} parent=71 // pred_check
          %p2444 = pneg %p332
        $region126: #{tpu_custom_call.1} parent=71 // pred_check_branch
          %2446 = sbr.rel (%p2444) target = $region128
        $region127: #{tpu_custom_call.1} parent=71 // pred_region
          %s2448 = ssub.s32 128, 128
          %2449 = vsyncadd %s2440, %s2448
          %s2450 = smul.addr %s36, 2
          %s2451 = smul.addr %s2450, 64
          %s2452 = scalar_lea.hbm %s13, %s2451
          %s2453 = sshll.u32 %s2443, 4
          %s2454 = int_to_ptr.vmem [resolvable:$true] %s2453
          %2459 = dma.vmem_to_hbm [thread:$0]  %s2454, 128, %s2452, %s2440, 64, 64, 4
        $region128: #{tpu_custom_call.1} parent=71 // pred_fallthru
          _
      $region72: #{tpu_custom_call.1} parent=5 // pred_fallthru
        _
      %p2460 = scmp.le.s32.totalorder 2, %s31
      // Predicated region
      $region129: #{tpu_custom_call.1} parent=5 // pred_check
        %p2461 = pneg %p2460
      $region130: #{tpu_custom_call.1} parent=5 // pred_check_branch
        %2463 = sbr.rel (%p2461) target = $region132
      $region131: #{tpu_custom_call.1} parent=5 // pred_region
        %s2464 = ssub.s32 %s31, 2
        // Predicated region
        $region133: #{tpu_custom_call.1} parent=131 // pred_check
          %p2465 = pneg %p338
        $region134: #{tpu_custom_call.1} parent=131 // pred_check_branch
          %2467 = sbr.rel (%p2465) target = $region136
        $region135: #{tpu_custom_call.1} parent=131 // pred_region
          %s2468 = sand.u32 %s323, 1
          %s2469 = scalar_lea.sflag [#allocation4], %s2468
          %s2470 = sand.u32 %s323, 1
          %s2471 = smul.addr %s2470, 8
          %s2472 = scalar_lea.vmem [#allocation23], %s2471
          %2473 = dma.done %s2469, 128
        $region136: #{tpu_custom_call.1} parent=131 // pred_fallthru
          _
      $region132: #{tpu_custom_call.1} parent=5 // pred_fallthru
        _
    $region6: #{tpu_custom_call.1} parent=1 // loop_footer
      %s35 = sadd.s32 1, %s31
    $region7: #{tpu_custom_call.1} parent=1 // loop_footer_branch
      %30 = sbr.rel target = $region3
    $region8: #{tpu_custom_call.1} parent=1 // loop_exit
      _
    %2474 = vsyncpa [#allocation3], 1
    %s2475 = scalar_lea.sflag [#allocation3], 1
    %2476 = vsyncpa %s2475, 1
    %2477 = vsyncpa [#allocation6], 1
    %2478 = vsyncpa [#allocation9], 1
    %2479 = vsyncpa [#allocation12], 1
    %2480 = vsyncpa [#allocation15], 1
    %2481 = vsyncpa [#allocation18], 1
    %2482 = vsyncpa [#allocation21], 1
    %2483 = vsyncpa [#allocation4], 1
    %s2484 = scalar_lea.sflag [#allocation4], 1
    %2485 = vsyncpa %s2484, 1

</llo_original>
